<compile_context>
chip_gen: v6e
topology: v6e:2x2x1
jax: 0.10.0
libtpu: 0.0.40
codegen_flags: <defaults>
</compile_context>

<pallas_src>
import functools

import jax
import jax.numpy as jnp
from jax import lax
from jax.experimental import pallas as pl
from jax.experimental.pallas import tpu as pltpu


# --------------------------------------------------------------------------
# Pallas kernel: fused single-layer LSTM (zero initial state) + fc_1 Linear.
# Single invocation; time recurrence is an in-kernel unrolled fori_loop.
# --------------------------------------------------------------------------
def _decoder_lstm_kernel(x_ref, wih_ref, whh_ref, b_ref, wfc_ref, bfc_ref,
                         out_ref, hT_ref, cT_ref,
                         gx_sc, h_all_sc, *, seq_len, batch, hidden):
    H = hidden
    B = batch  # padded batch (multiple of 8)

    # ---- 1) hoisted input projection: one big MXU matmul over all timesteps.
    #      gates_x[t*B + b, :] = x[t, b, :] @ W_ih^T + (b_ih + b_hh)
    gx_sc[...] = (jnp.dot(x_ref[...], wih_ref[...],
                          preferred_element_type=jnp.float32)
                  + b_ref[...])

    w_hh = whh_ref[...]  # (H, 4H) -- stays resident across the recurrence

    # ---- 2) serial recurrence: per step only h_prev @ W_hh plus elementwise.
    def step(t, carry):
        h_prev, c_prev = carry
        row = t * B                                         # sublane-aligned
        gates = gx_sc[pl.ds(row, B), :] + jnp.dot(
            h_prev, w_hh, preferred_element_type=jnp.float32)   # (B, 4H)
        # full-vreg transcendentals (EUP), then lane-range extracts
        sg = jax.nn.sigmoid(gates)
        tg = jnp.tanh(gates)
        i_g = sg[:, 0 * H:1 * H]
        f_g = sg[:, 1 * H:2 * H]
        g_g = tg[:, 2 * H:3 * H]
        o_g = sg[:, 3 * H:4 * H]
        c_new = f_g * c_prev + i_g * g_g
        h_new = o_g * jnp.tanh(c_new)
        h_all_sc[pl.ds(row, B), :] = h_new
        return h_new, c_new

    h0 = jnp.zeros((B, H), jnp.float32)
    c0 = jnp.zeros((B, H), jnp.float32)
    h_T, c_T = lax.fori_loop(0, seq_len, step, (h0, c0), unroll=True)

    # ---- 3) epilogue: hoisted fc_1, one matmul, lane-dense (128-wide) store.
    out_ref[...] = (jnp.dot(h_all_sc[...], wfc_ref[...],
                            preferred_element_type=jnp.float32)
                    + bfc_ref[...]).astype(out_ref.dtype)
    hT_ref[...] = h_T
    cT_ref[...] = c_T


def lstm_fc_pallas(x_tbf, w_ih, w_hh, b_all, w_fc, b_fc, *, hidden):
    """x_tbf: (T, B, F_in) f32.  Returns (out (T, B, out_dim), h_T, c_T)."""
    T, B, F_in = x_tbf.shape
    out_dim = w_fc.shape[1]

    B_pad = (B + 7) // 8 * 8                               # fill f32 sublanes
    OUT_PAD = max(128, (out_dim + 127) // 128 * 128)       # lane-dense store

    x_p = jnp.pad(x_tbf, ((0, 0), (0, B_pad - B), (0, 0)))
    x2d = x_p.reshape(T * B_pad, F_in)                     # row = t*B_pad + b
    w_fc_p = jnp.pad(w_fc, ((0, 0), (0, OUT_PAD - out_dim)))
    b_fc_p = jnp.pad(b_fc, ((0, 0), (0, OUT_PAD - out_dim)))

    kernel = functools.partial(_decoder_lstm_kernel,
                               seq_len=T, batch=B_pad, hidden=hidden)

    out2d, h_T, c_T = pl.pallas_call(
        kernel,
        out_shape=(
            jax.ShapeDtypeStruct((T * B_pad, OUT_PAD), jnp.float32),
            jax.ShapeDtypeStruct((B_pad, hidden), jnp.float32),
            jax.ShapeDtypeStruct((B_pad, hidden), jnp.float32),
        ),
        grid=(1,),
        in_specs=[
            pl.BlockSpec((T * B_pad, F_in), lambda i: (0, 0)),       # x, flat T*B
            pl.BlockSpec((F_in, 4 * hidden), lambda i: (0, 0)),       # W_ih^T
            pl.BlockSpec((hidden, 4 * hidden), lambda i: (0, 0)),     # W_hh^T
            pl.BlockSpec((1, 4 * hidden), lambda i: (0, 0)),          # b_ih+b_hh
            pl.BlockSpec((hidden, OUT_PAD), lambda i: (0, 0)),        # W_fc^T (pad)
            pl.BlockSpec((1, OUT_PAD), lambda i: (0, 0)),             # b_fc (pad)
        ],
        out_specs=(
            pl.BlockSpec((T * B_pad, OUT_PAD), lambda i: (0, 0)),     # result slab
            pl.BlockSpec((B_pad, hidden), lambda i: (0, 0)),          # final h
            pl.BlockSpec((B_pad, hidden), lambda i: (0, 0)),          # final c
        ),
        scratch_shapes=[
            pltpu.VMEM((T * B_pad, 4 * hidden), jnp.float32),         # gates_x
            pltpu.VMEM((T * B_pad, hidden), jnp.float32),             # h per step
        ],
        compiler_params=pltpu.CompilerParams(
            dimension_semantics=("arbitrary",)),
    )(x2d, w_ih, w_hh, b_all, w_fc_p, b_fc_p)

    out = out2d.reshape(T, B_pad, OUT_PAD)[:, :B, :out_dim]
    return out, h_T[:B], c_T[:B]


# --------------------------------------------------------------------------
# Glue: message routing (mask + drop-own-message) and shape plumbing.
# --------------------------------------------------------------------------
def build_decoder_input(obs_in, msg, n_agents):
    ep, T, A, msg_dim = msg.shape
    assert A == n_agents
    # msg.repeat(1,1,A,1).reshape(ep,T,A,A,-1): entry [i, j] = msg of agent j
    msg_rep = jnp.broadcast_to(msg[:, :, None, :, :], (ep, T, A, A, msg_dim))
    # multiply by |eye-1| then drop the (now all-zero) diagonal entries:
    # equivalent (for nonzero msgs) to gathering senders j != i in order of j.
    idx = jnp.array([[j for j in range(A) if j != i] for i in range(A)],
                    dtype=jnp.int32)                                  # (A, A-1)
    recv = jnp.arange(A, dtype=jnp.int32)[:, None]                    # (A, 1)
    msg_others = msg_rep[:, :, recv, idx, :]                          # (ep,T,A,A-1,md)
    msg_flat = msg_others.reshape(ep, T, A, (A - 1) * msg_dim)
    dec_in = jnp.concatenate([obs_in, msg_flat], axis=-1)             # (ep,T,A,in_sh)
    return dec_in.reshape(ep, T, -1)                                  # (ep,T,A*in_sh)


def decoder_reg_forward(params, obs_in, msg, n_agents, hidden, out_per_agent):
    ep, T = obs_in.shape[0], obs_in.shape[1]
    dec_in = build_decoder_input(obs_in, msg, n_agents)               # (ep, T, F_in)
    x_tbf = jnp.transpose(dec_in, (1, 0, 2)).astype(jnp.float32)      # (T, ep, F_in)

    out_tbf, h_T, c_T = lstm_fc_pallas(
        x_tbf, params["w_ih_T"], params["w_hh_T"], params["b_all"],
        params["w_fc_T"], params["b_fc"], hidden=hidden)

    result = jnp.transpose(out_tbf, (1, 0, 2)).reshape(ep, T, n_agents, out_per_agent)
    final_state = (h_T[None], c_T[None])   # (num_layers=1, B, H) each, like PyTorch
    return result, final_state


# --------------------------------------------------------------------------
# Pure-JAX reference (lax.scan LSTM) for a correctness sanity check.
# --------------------------------------------------------------------------
def lstm_fc_ref(x_tbf, w_ih, w_hh, b_all, w_fc, b_fc, hidden):
    B = x_tbf.shape[1]
    H = hidden

    def step(carry, x):
        h, c = carry
        gates = x @ w_ih + h @ w_hh + b_all
        i = jax.nn.sigmoid(gates[:, 0 * H:1 * H])
        f = jax.nn.sigmoid(gates[:, 1 * H:2 * H])
        g = jnp.tanh(gates[:, 2 * H:3 * H])
        o = jax.nn.sigmoid(gates[:, 3 * H:4 * H])
        c = f * c + i * g
        h = o * jnp.tanh(c)
        return (h, c), h @ w_fc + b_fc

    init = (jnp.zeros((B, H), jnp.float32), jnp.zeros((B, H), jnp.float32))
    (h_T, c_T), out = lax.scan(step, init, x_tbf)
    return out, h_T, c_T


if __name__ == "__main__":
    # --- synthetic config (args) ---
    ep_num, T = 2, 8
    n_agents = 3
    obs_dim = 5
    msg_dim = 4
    input_shape_in = obs_dim + (n_agents - 1) * msg_dim      # 13
    input_shape_out = 6
    rnn_hidden_dim = 32
    lstm_in = input_shape_in * n_agents                      # 39
    fc_out = input_shape_out * n_agents                      # 18

    key = jax.random.PRNGKey(0)
    k = jax.random.split(key, 8)
    scale = 1.0 / jnp.sqrt(rnn_hidden_dim)

    # Deterministic synthetic parameters (PyTorch LSTM/Linear shapes, stored transposed).
    params = {
        "w_ih_T": jax.random.uniform(k[0], (lstm_in, 4 * rnn_hidden_dim),
                                     jnp.float32, -scale, scale),
        "w_hh_T": jax.random.uniform(k[1], (rnn_hidden_dim, 4 * rnn_hidden_dim),
                                     jnp.float32, -scale, scale),
        "b_all": (jax.random.uniform(k[2], (1, 4 * rnn_hidden_dim), jnp.float32,
                                     -scale, scale)
                  + jax.random.uniform(k[3], (1, 4 * rnn_hidden_dim), jnp.float32,
                                       -scale, scale)),     # b_ih + b_hh
        "w_fc_T": jax.random.uniform(k[4], (rnn_hidden_dim, fc_out),
                                     jnp.float32, -scale, scale),
        "b_fc": jax.random.uniform(k[5], (1, fc_out), jnp.float32, -scale, scale),
    }

    obs_in = jax.random.normal(k[6], (ep_num, T, n_agents, obs_dim), jnp.float32)
    msg = jax.random.normal(k[7], (ep_num, T, n_agents, msg_dim), jnp.float32)

    result, (h_n, c_n) = decoder_reg_forward(
        params, obs_in, msg, n_agents, rnn_hidden_dim, input_shape_out)
    jax.block_until_ready(result)
    jax.block_until_ready(h_n)
    jax.block_until_ready(c_n)

    # sanity check against pure-JAX reference
    dec_in = build_decoder_input(obs_in, msg, n_agents)
    x_tbf = jnp.transpose(dec_in, (1, 0, 2))
    out_ref, h_ref, c_ref = lstm_fc_ref(
        x_tbf, params["w_ih_T"], params["w_hh_T"], params["b_all"],
        params["w_fc_T"], params["b_fc"], rnn_hidden_dim)
    result_ref = jnp.transpose(out_ref, (1, 0, 2)).reshape(
        ep_num, T, n_agents, input_shape_out)

    assert result.shape == (ep_num, T, n_agents, input_shape_out)
    assert h_n.shape == (1, ep_num, rnn_hidden_dim)
    assert c_n.shape == (1, ep_num, rnn_hidden_dim)
    assert jnp.allclose(result, result_ref, atol=1e-4), "result mismatch"
    assert jnp.allclose(h_n[0], h_ref, atol=1e-4), "h_n mismatch"
    assert jnp.allclose(c_n[0], c_ref, atol=1e-4), "c_n mismatch"

    print("KERNEL_OK")
</pallas_src>

<mosaic_0001>
module attributes {stable_mosaic.version = 11 : i64} {
  func.func @_decoder_lstm_kernel(%arg0: i32, %arg1: memref<64x39xf32, #tpu.memory_space<vmem>>, %arg2: memref<39x128xf32, #tpu.memory_space<vmem>>, %arg3: memref<32x128xf32, #tpu.memory_space<vmem>>, %arg4: memref<1x128xf32, #tpu.memory_space<vmem>>, %arg5: memref<32x128xf32, #tpu.memory_space<vmem>>, %arg6: memref<1x128xf32, #tpu.memory_space<vmem>>, %arg7: memref<64x128xf32, #tpu.memory_space<vmem>>, %arg8: memref<8x32xf32, #tpu.memory_space<vmem>>, %arg9: memref<8x32xf32, #tpu.memory_space<vmem>>, %arg10: memref<64x128xf32, #tpu.memory_space<vmem>>, %arg11: memref<64x32xf32, #tpu.memory_space<vmem>>) attributes {dimension_semantics = [#tpu.dimension_semantics<arbitrary>], iteration_bounds = array<i64: 1>, scalar_prefetch = 0 : i64, scratch_operands = 2 : i64, tpu.core_type = #tpu.core_type<tc>, window_params = [{pipeline_mode = #tpu.pipeline_mode<synchronous>, transform_indices = @transform_0, window_bounds = array<i64: 64, 39>}, {pipeline_mode = #tpu.pipeline_mode<synchronous>, transform_indices = @transform_1, window_bounds = array<i64: 39, 128>}, {pipeline_mode = #tpu.pipeline_mode<synchronous>, transform_indices = @transform_2, window_bounds = array<i64: 32, 128>}, {pipeline_mode = #tpu.pipeline_mode<synchronous>, transform_indices = @transform_3, window_bounds = array<i64: 1, 128>}, {pipeline_mode = #tpu.pipeline_mode<synchronous>, transform_indices = @transform_4, window_bounds = array<i64: 32, 128>}, {pipeline_mode = #tpu.pipeline_mode<synchronous>, transform_indices = @transform_5, window_bounds = array<i64: 1, 128>}, {pipeline_mode = #tpu.pipeline_mode<synchronous>, transform_indices = @transform_6, window_bounds = array<i64: 64, 128>}, {pipeline_mode = #tpu.pipeline_mode<synchronous>, transform_indices = @transform_7, window_bounds = array<i64: 8, 32>}, {pipeline_mode = #tpu.pipeline_mode<synchronous>, transform_indices = @transform_8, window_bounds = array<i64: 8, 32>}]} {
    %c0 = arith.constant 0 : index
    %c0_0 = arith.constant 0 : index
    %0 = vector.load %arg1[%c0, %c0_0] : memref<64x39xf32, #tpu.memory_space<vmem>>, vector<64x39xf32>
    %c0_1 = arith.constant 0 : index
    %c0_2 = arith.constant 0 : index
    %1 = vector.load %arg2[%c0_1, %c0_2] : memref<39x128xf32, #tpu.memory_space<vmem>>, vector<39x128xf32>
    %cst = arith.constant dense<0.000000e+00> : vector<64x128xf32>
    %2 = tpu.matmul %0, %1, %cst {dimension_numbers = #tpu.dot_dimension_numbers<[1], [0], [0], [1], [0, 0, 1, 1], [], []>} : vector<64x39xf32>, vector<39x128xf32>, vector<64x128xf32> -> vector<64x128xf32>
    %c0_3 = arith.constant 0 : index
    %c0_4 = arith.constant 0 : index
    %3 = vector.load %arg4[%c0_3, %c0_4] : memref<1x128xf32, #tpu.memory_space<vmem>>, vector<1x128xf32>
    %4 = vector.broadcast %3 : vector<1x128xf32> to vector<64x128xf32>
    %5 = arith.addf %2, %4 : vector<64x128xf32>
    %c0_5 = arith.constant 0 : index
    %c0_6 = arith.constant 0 : index
    %6 = vector.load %arg10[%c0_5, %c0_6] : memref<64x128xf32, #tpu.memory_space<vmem>>, vector<64x128xf32>
    tpu.vector_store %arg10[%c0_5, %c0_6], %5 {strides = array<i32>} : memref<64x128xf32, #tpu.memory_space<vmem>>, vector<64x128xf32>,
    %c0_7 = arith.constant 0 : index
    %c0_8 = arith.constant 0 : index
    %7 = vector.load %arg3[%c0_7, %c0_8] : memref<32x128xf32, #tpu.memory_space<vmem>>, vector<32x128xf32>
    %cst_9 = arith.constant 0.000000e+00 : f32
    %8 = vector.broadcast %cst_9 : f32 to vector<8x32xf32>
    %cst_10 = arith.constant 0.000000e+00 : f32
    %9 = vector.broadcast %cst_10 : f32 to vector<8x32xf32>
    %c0_i32 = arith.constant 0 : i32
    %c8_i32 = arith.constant 8 : i32
    %10 = arith.muli %c0_i32, %c8_i32 : i32
    %11 = arith.index_cast %10 : i32 to index
    %c0_11 = arith.constant 0 : index
    %12 = vector.load %arg10[%11, %c0_11] : memref<64x128xf32, #tpu.memory_space<vmem>>, vector<8x128xf32>
    %cst_12 = arith.constant dense<0.000000e+00> : vector<8x128xf32>
    %13 = tpu.matmul %8, %7, %cst_12 {dimension_numbers = #tpu.dot_dimension_numbers<[1], [0], [0], [1], [0, 0, 1, 1], [], []>} : vector<8x32xf32>, vector<32x128xf32>, vector<8x128xf32> -> vector<8x128xf32>
    %14 = arith.addf %12, %13 : vector<8x128xf32>
    %15 = arith.negf %14 : vector<8x128xf32>
    %16 = math.exp %15 : vector<8x128xf32>
    %cst_13 = arith.constant 1.000000e+00 : f32
    %17 = vector.broadcast %cst_13 : f32 to vector<8x128xf32>
    %18 = arith.addf %17, %16 : vector<8x128xf32>
    %19 = arith.divf %17, %18 : vector<8x128xf32>
    %20 = math.tanh %14 : vector<8x128xf32>
    %21 = vector.extract_strided_slice %19 {offsets = [0, 0], sizes = [8, 32], strides = [1, 1]} : vector<8x128xf32> to vector<8x32xf32>
    %22 = vector.extract_strided_slice %19 {offsets = [0, 32], sizes = [8, 32], strides = [1, 1]} : vector<8x128xf32> to vector<8x32xf32>
    %23 = vector.extract_strided_slice %20 {offsets = [0, 64], sizes = [8, 32], strides = [1, 1]} : vector<8x128xf32> to vector<8x32xf32>
    %24 = vector.extract_strided_slice %19 {offsets = [0, 96], sizes = [8, 32], strides = [1, 1]} : vector<8x128xf32> to vector<8x32xf32>
    %25 = arith.mulf %22, %9 : vector<8x32xf32>
    %26 = arith.mulf %21, %23 : vector<8x32xf32>
    %27 = arith.addf %25, %26 : vector<8x32xf32>
    %28 = math.tanh %27 : vector<8x32xf32>
    %29 = arith.mulf %24, %28 : vector<8x32xf32>
    %30 = arith.index_cast %10 : i32 to index
    %c0_14 = arith.constant 0 : index
    %31 = vector.load %arg11[%30, %c0_14] : memref<64x32xf32, #tpu.memory_space<vmem>>, vector<8x32xf32>
    tpu.vector_store %arg11[%30, %c0_14], %29 {strides = array<i32>} : memref<64x32xf32, #tpu.memory_space<vmem>>, vector<8x32xf32>,
    %c1_i32 = arith.constant 1 : i32
    %c8_i32_15 = arith.constant 8 : i32
    %32 = arith.muli %c1_i32, %c8_i32_15 : i32
    %33 = arith.index_cast %32 : i32 to index
    %c0_16 = arith.constant 0 : index
    %34 = vector.load %arg10[%33, %c0_16] : memref<64x128xf32, #tpu.memory_space<vmem>>, vector<8x128xf32>
    %cst_17 = arith.constant dense<0.000000e+00> : vector<8x128xf32>
    %35 = tpu.matmul %29, %7, %cst_17 {dimension_numbers = #tpu.dot_dimension_numbers<[1], [0], [0], [1], [0, 0, 1, 1], [], []>} : vector<8x32xf32>, vector<32x128xf32>, vector<8x128xf32> -> vector<8x128xf32>
    %36 = arith.addf %34, %35 : vector<8x128xf32>
    %37 = arith.negf %36 : vector<8x128xf32>
    %38 = math.exp %37 : vector<8x128xf32>
    %cst_18 = arith.constant 1.000000e+00 : f32
    %39 = vector.broadcast %cst_18 : f32 to vector<8x128xf32>
    %40 = arith.addf %39, %38 : vector<8x128xf32>
    %41 = arith.divf %39, %40 : vector<8x128xf32>
    %42 = math.tanh %36 : vector<8x128xf32>
    %43 = vector.extract_strided_slice %41 {offsets = [0, 0], sizes = [8, 32], strides = [1, 1]} : vector<8x128xf32> to vector<8x32xf32>
    %44 = vector.extract_strided_slice %41 {offsets = [0, 32], sizes = [8, 32], strides = [1, 1]} : vector<8x128xf32> to vector<8x32xf32>
    %45 = vector.extract_strided_slice %42 {offsets = [0, 64], sizes = [8, 32], strides = [1, 1]} : vector<8x128xf32> to vector<8x32xf32>
    %46 = vector.extract_strided_slice %41 {offsets = [0, 96], sizes = [8, 32], strides = [1, 1]} : vector<8x128xf32> to vector<8x32xf32>
    %47 = arith.mulf %44, %27 : vector<8x32xf32>
    %48 = arith.mulf %43, %45 : vector<8x32xf32>
    %49 = arith.addf %47, %48 : vector<8x32xf32>
    %50 = math.tanh %49 : vector<8x32xf32>
    %51 = arith.mulf %46, %50 : vector<8x32xf32>
    %52 = arith.index_cast %32 : i32 to index
    %c0_19 = arith.constant 0 : index
    %53 = vector.load %arg11[%52, %c0_19] : memref<64x32xf32, #tpu.memory_space<vmem>>, vector<8x32xf32>
    tpu.vector_store %arg11[%52, %c0_19], %51 {strides = array<i32>} : memref<64x32xf32, #tpu.memory_space<vmem>>, vector<8x32xf32>,
    %c2_i32 = arith.constant 2 : i32
    %c8_i32_20 = arith.constant 8 : i32
    %54 = arith.muli %c2_i32, %c8_i32_20 : i32
    %55 = arith.index_cast %54 : i32 to index
    %c0_21 = arith.constant 0 : index
    %56 = vector.load %arg10[%55, %c0_21] : memref<64x128xf32, #tpu.memory_space<vmem>>, vector<8x128xf32>
    %cst_22 = arith.constant dense<0.000000e+00> : vector<8x128xf32>
    %57 = tpu.matmul %51, %7, %cst_22 {dimension_numbers = #tpu.dot_dimension_numbers<[1], [0], [0], [1], [0, 0, 1, 1], [], []>} : vector<8x32xf32>, vector<32x128xf32>, vector<8x128xf32> -> vector<8x128xf32>
    %58 = arith.addf %56, %57 : vector<8x128xf32>
    %59 = arith.negf %58 : vector<8x128xf32>
    %60 = math.exp %59 : vector<8x128xf32>
    %cst_23 = arith.constant 1.000000e+00 : f32
    %61 = vector.broadcast %cst_23 : f32 to vector<8x128xf32>
    %62 = arith.addf %61, %60 : vector<8x128xf32>
    %63 = arith.divf %61, %62 : vector<8x128xf32>
    %64 = math.tanh %58 : vector<8x128xf32>
    %65 = vector.extract_strided_slice %63 {offsets = [0, 0], sizes = [8, 32], strides = [1, 1]} : vector<8x128xf32> to vector<8x32xf32>
    %66 = vector.extract_strided_slice %63 {offsets = [0, 32], sizes = [8, 32], strides = [1, 1]} : vector<8x128xf32> to vector<8x32xf32>
    %67 = vector.extract_strided_slice %64 {offsets = [0, 64], sizes = [8, 32], strides = [1, 1]} : vector<8x128xf32> to vector<8x32xf32>
    %68 = vector.extract_strided_slice %63 {offsets = [0, 96], sizes = [8, 32], strides = [1, 1]} : vector<8x128xf32> to vector<8x32xf32>
    %69 = arith.mulf %66, %49 : vector<8x32xf32>
    %70 = arith.mulf %65, %67 : vector<8x32xf32>
    %71 = arith.addf %69, %70 : vector<8x32xf32>
    %72 = math.tanh %71 : vector<8x32xf32>
    %73 = arith.mulf %68, %72 : vector<8x32xf32>
    %74 = arith.index_cast %54 : i32 to index
    %c0_24 = arith.constant 0 : index
    %75 = vector.load %arg11[%74, %c0_24] : memref<64x32xf32, #tpu.memory_space<vmem>>, vector<8x32xf32>
    tpu.vector_store %arg11[%74, %c0_24], %73 {strides = array<i32>} : memref<64x32xf32, #tpu.memory_space<vmem>>, vector<8x32xf32>,
    %c3_i32 = arith.constant 3 : i32
    %c8_i32_25 = arith.constant 8 : i32
    %76 = arith.muli %c3_i32, %c8_i32_25 : i32
    %77 = arith.index_cast %76 : i32 to index
    %c0_26 = arith.constant 0 : index
    %78 = vector.load %arg10[%77, %c0_26] : memref<64x128xf32, #tpu.memory_space<vmem>>, vector<8x128xf32>
    %cst_27 = arith.constant dense<0.000000e+00> : vector<8x128xf32>
    %79 = tpu.matmul %73, %7, %cst_27 {dimension_numbers = #tpu.dot_dimension_numbers<[1], [0], [0], [1], [0, 0, 1, 1], [], []>} : vector<8x32xf32>, vector<32x128xf32>, vector<8x128xf32> -> vector<8x128xf32>
    %80 = arith.addf %78, %79 : vector<8x128xf32>
    %81 = arith.negf %80 : vector<8x128xf32>
    %82 = math.exp %81 : vector<8x128xf32>
    %cst_28 = arith.constant 1.000000e+00 : f32
    %83 = vector.broadcast %cst_28 : f32 to vector<8x128xf32>
    %84 = arith.addf %83, %82 : vector<8x128xf32>
    %85 = arith.divf %83, %84 : vector<8x128xf32>
    %86 = math.tanh %80 : vector<8x128xf32>
    %87 = vector.extract_strided_slice %85 {offsets = [0, 0], sizes = [8, 32], strides = [1, 1]} : vector<8x128xf32> to vector<8x32xf32>
    %88 = vector.extract_strided_slice %85 {offsets = [0, 32], sizes = [8, 32], strides = [1, 1]} : vector<8x128xf32> to vector<8x32xf32>
    %89 = vector.extract_strided_slice %86 {offsets = [0, 64], sizes = [8, 32], strides = [1, 1]} : vector<8x128xf32> to vector<8x32xf32>
    %90 = vector.extract_strided_slice %85 {offsets = [0, 96], sizes = [8, 32], strides = [1, 1]} : vector<8x128xf32> to vector<8x32xf32>
    %91 = arith.mulf %88, %71 : vector<8x32xf32>
    %92 = arith.mulf %87, %89 : vector<8x32xf32>
    %93 = arith.addf %91, %92 : vector<8x32xf32>
    %94 = math.tanh %93 : vector<8x32xf32>
    %95 = arith.mulf %90, %94 : vector<8x32xf32>
    %96 = arith.index_cast %76 : i32 to index
    %c0_29 = arith.constant 0 : index
    %97 = vector.load %arg11[%96, %c0_29] : memref<64x32xf32, #tpu.memory_space<vmem>>, vector<8x32xf32>
    tpu.vector_store %arg11[%96, %c0_29], %95 {strides = array<i32>} : memref<64x32xf32, #tpu.memory_space<vmem>>, vector<8x32xf32>,
    %c4_i32 = arith.constant 4 : i32
    %c8_i32_30 = arith.constant 8 : i32
    %98 = arith.muli %c4_i32, %c8_i32_30 : i32
    %99 = arith.index_cast %98 : i32 to index
    %c0_31 = arith.constant 0 : index
    %100 = vector.load %arg10[%99, %c0_31] : memref<64x128xf32, #tpu.memory_space<vmem>>, vector<8x128xf32>
    %cst_32 = arith.constant dense<0.000000e+00> : vector<8x128xf32>
    %101 = tpu.matmul %95, %7, %cst_32 {dimension_numbers = #tpu.dot_dimension_numbers<[1], [0], [0], [1], [0, 0, 1, 1], [], []>} : vector<8x32xf32>, vector<32x128xf32>, vector<8x128xf32> -> vector<8x128xf32>
    %102 = arith.addf %100, %101 : vector<8x128xf32>
    %103 = arith.negf %102 : vector<8x128xf32>
    %104 = math.exp %103 : vector<8x128xf32>
    %cst_33 = arith.constant 1.000000e+00 : f32
    %105 = vector.broadcast %cst_33 : f32 to vector<8x128xf32>
    %106 = arith.addf %105, %104 : vector<8x128xf32>
    %107 = arith.divf %105, %106 : vector<8x128xf32>
    %108 = math.tanh %102 : vector<8x128xf32>
    %109 = vector.extract_strided_slice %107 {offsets = [0, 0], sizes = [8, 32], strides = [1, 1]} : vector<8x128xf32> to vector<8x32xf32>
    %110 = vector.extract_strided_slice %107 {offsets = [0, 32], sizes = [8, 32], strides = [1, 1]} : vector<8x128xf32> to vector<8x32xf32>
    %111 = vector.extract_strided_slice %108 {offsets = [0, 64], sizes = [8, 32], strides = [1, 1]} : vector<8x128xf32> to vector<8x32xf32>
    %112 = vector.extract_strided_slice %107 {offsets = [0, 96], sizes = [8, 32], strides = [1, 1]} : vector<8x128xf32> to vector<8x32xf32>
    %113 = arith.mulf %110, %93 : vector<8x32xf32>
    %114 = arith.mulf %109, %111 : vector<8x32xf32>
    %115 = arith.addf %113, %114 : vector<8x32xf32>
    %116 = math.tanh %115 : vector<8x32xf32>
    %117 = arith.mulf %112, %116 : vector<8x32xf32>
    %118 = arith.index_cast %98 : i32 to index
    %c0_34 = arith.constant 0 : index
    %119 = vector.load %arg11[%118, %c0_34] : memref<64x32xf32, #tpu.memory_space<vmem>>, vector<8x32xf32>
    tpu.vector_store %arg11[%118, %c0_34], %117 {strides = array<i32>} : memref<64x32xf32, #tpu.memory_space<vmem>>, vector<8x32xf32>,
    %c5_i32 = arith.constant 5 : i32
    %c8_i32_35 = arith.constant 8 : i32
    %120 = arith.muli %c5_i32, %c8_i32_35 : i32
    %121 = arith.index_cast %120 : i32 to index
    %c0_36 = arith.constant 0 : index
    %122 = vector.load %arg10[%121, %c0_36] : memref<64x128xf32, #tpu.memory_space<vmem>>, vector<8x128xf32>
    %cst_37 = arith.constant dense<0.000000e+00> : vector<8x128xf32>
    %123 = tpu.matmul %117, %7, %cst_37 {dimension_numbers = #tpu.dot_dimension_numbers<[1], [0], [0], [1], [0, 0, 1, 1], [], []>} : vector<8x32xf32>, vector<32x128xf32>, vector<8x128xf32> -> vector<8x128xf32>
    %124 = arith.addf %122, %123 : vector<8x128xf32>
    %125 = arith.negf %124 : vector<8x128xf32>
    %126 = math.exp %125 : vector<8x128xf32>
    %cst_38 = arith.constant 1.000000e+00 : f32
    %127 = vector.broadcast %cst_38 : f32 to vector<8x128xf32>
    %128 = arith.addf %127, %126 : vector<8x128xf32>
    %129 = arith.divf %127, %128 : vector<8x128xf32>
    %130 = math.tanh %124 : vector<8x128xf32>
    %131 = vector.extract_strided_slice %129 {offsets = [0, 0], sizes = [8, 32], strides = [1, 1]} : vector<8x128xf32> to vector<8x32xf32>
    %132 = vector.extract_strided_slice %129 {offsets = [0, 32], sizes = [8, 32], strides = [1, 1]} : vector<8x128xf32> to vector<8x32xf32>
    %133 = vector.extract_strided_slice %130 {offsets = [0, 64], sizes = [8, 32], strides = [1, 1]} : vector<8x128xf32> to vector<8x32xf32>
    %134 = vector.extract_strided_slice %129 {offsets = [0, 96], sizes = [8, 32], strides = [1, 1]} : vector<8x128xf32> to vector<8x32xf32>
    %135 = arith.mulf %132, %115 : vector<8x32xf32>
    %136 = arith.mulf %131, %133 : vector<8x32xf32>
    %137 = arith.addf %135, %136 : vector<8x32xf32>
    %138 = math.tanh %137 : vector<8x32xf32>
    %139 = arith.mulf %134, %138 : vector<8x32xf32>
    %140 = arith.index_cast %120 : i32 to index
    %c0_39 = arith.constant 0 : index
    %141 = vector.load %arg11[%140, %c0_39] : memref<64x32xf32, #tpu.memory_space<vmem>>, vector<8x32xf32>
    tpu.vector_store %arg11[%140, %c0_39], %139 {strides = array<i32>} : memref<64x32xf32, #tpu.memory_space<vmem>>, vector<8x32xf32>,
    %c6_i32 = arith.constant 6 : i32
    %c8_i32_40 = arith.constant 8 : i32
    %142 = arith.muli %c6_i32, %c8_i32_40 : i32
    %143 = arith.index_cast %142 : i32 to index
    %c0_41 = arith.constant 0 : index
    %144 = vector.load %arg10[%143, %c0_41] : memref<64x128xf32, #tpu.memory_space<vmem>>, vector<8x128xf32>
    %cst_42 = arith.constant dense<0.000000e+00> : vector<8x128xf32>
    %145 = tpu.matmul %139, %7, %cst_42 {dimension_numbers = #tpu.dot_dimension_numbers<[1], [0], [0], [1], [0, 0, 1, 1], [], []>} : vector<8x32xf32>, vector<32x128xf32>, vector<8x128xf32> -> vector<8x128xf32>
    %146 = arith.addf %144, %145 : vector<8x128xf32>
    %147 = arith.negf %146 : vector<8x128xf32>
    %148 = math.exp %147 : vector<8x128xf32>
    %cst_43 = arith.constant 1.000000e+00 : f32
    %149 = vector.broadcast %cst_43 : f32 to vector<8x128xf32>
    %150 = arith.addf %149, %148 : vector<8x128xf32>
    %151 = arith.divf %149, %150 : vector<8x128xf32>
    %152 = math.tanh %146 : vector<8x128xf32>
    %153 = vector.extract_strided_slice %151 {offsets = [0, 0], sizes = [8, 32], strides = [1, 1]} : vector<8x128xf32> to vector<8x32xf32>
    %154 = vector.extract_strided_slice %151 {offsets = [0, 32], sizes = [8, 32], strides = [1, 1]} : vector<8x128xf32> to vector<8x32xf32>
    %155 = vector.extract_strided_slice %152 {offsets = [0, 64], sizes = [8, 32], strides = [1, 1]} : vector<8x128xf32> to vector<8x32xf32>
    %156 = vector.extract_strided_slice %151 {offsets = [0, 96], sizes = [8, 32], strides = [1, 1]} : vector<8x128xf32> to vector<8x32xf32>
    %157 = arith.mulf %154, %137 : vector<8x32xf32>
    %158 = arith.mulf %153, %155 : vector<8x32xf32>
    %159 = arith.addf %157, %158 : vector<8x32xf32>
    %160 = math.tanh %159 : vector<8x32xf32>
    %161 = arith.mulf %156, %160 : vector<8x32xf32>
    %162 = arith.index_cast %142 : i32 to index
    %c0_44 = arith.constant 0 : index
    %163 = vector.load %arg11[%162, %c0_44] : memref<64x32xf32, #tpu.memory_space<vmem>>, vector<8x32xf32>
    tpu.vector_store %arg11[%162, %c0_44], %161 {strides = array<i32>} : memref<64x32xf32, #tpu.memory_space<vmem>>, vector<8x32xf32>,
    %c7_i32 = arith.constant 7 : i32
    %c8_i32_45 = arith.constant 8 : i32
    %164 = arith.muli %c7_i32, %c8_i32_45 : i32
    %165 = arith.index_cast %164 : i32 to index
    %c0_46 = arith.constant 0 : index
    %166 = vector.load %arg10[%165, %c0_46] : memref<64x128xf32, #tpu.memory_space<vmem>>, vector<8x128xf32>
    %cst_47 = arith.constant dense<0.000000e+00> : vector<8x128xf32>
    %167 = tpu.matmul %161, %7, %cst_47 {dimension_numbers = #tpu.dot_dimension_numbers<[1], [0], [0], [1], [0, 0, 1, 1], [], []>} : vector<8x32xf32>, vector<32x128xf32>, vector<8x128xf32> -> vector<8x128xf32>
    %168 = arith.addf %166, %167 : vector<8x128xf32>
    %169 = arith.negf %168 : vector<8x128xf32>
    %170 = math.exp %169 : vector<8x128xf32>
    %cst_48 = arith.constant 1.000000e+00 : f32
    %171 = vector.broadcast %cst_48 : f32 to vector<8x128xf32>
    %172 = arith.addf %171, %170 : vector<8x128xf32>
    %173 = arith.divf %171, %172 : vector<8x128xf32>
    %174 = math.tanh %168 : vector<8x128xf32>
    %175 = vector.extract_strided_slice %173 {offsets = [0, 0], sizes = [8, 32], strides = [1, 1]} : vector<8x128xf32> to vector<8x32xf32>
    %176 = vector.extract_strided_slice %173 {offsets = [0, 32], sizes = [8, 32], strides = [1, 1]} : vector<8x128xf32> to vector<8x32xf32>
    %177 = vector.extract_strided_slice %174 {offsets = [0, 64], sizes = [8, 32], strides = [1, 1]} : vector<8x128xf32> to vector<8x32xf32>
    %178 = vector.extract_strided_slice %173 {offsets = [0, 96], sizes = [8, 32], strides = [1, 1]} : vector<8x128xf32> to vector<8x32xf32>
    %179 = arith.mulf %176, %159 : vector<8x32xf32>
    %180 = arith.mulf %175, %177 : vector<8x32xf32>
    %181 = arith.addf %179, %180 : vector<8x32xf32>
    %182 = math.tanh %181 : vector<8x32xf32>
    %183 = arith.mulf %178, %182 : vector<8x32xf32>
    %184 = arith.index_cast %164 : i32 to index
    %c0_49 = arith.constant 0 : index
    %185 = vector.load %arg11[%184, %c0_49] : memref<64x32xf32, #tpu.memory_space<vmem>>, vector<8x32xf32>
    tpu.vector_store %arg11[%184, %c0_49], %183 {strides = array<i32>} : memref<64x32xf32, #tpu.memory_space<vmem>>, vector<8x32xf32>,
    %c8_i32_50 = arith.constant 8 : i32
    %c0_51 = arith.constant 0 : index
    %c0_52 = arith.constant 0 : index
    %186 = vector.load %arg11[%c0_51, %c0_52] : memref<64x32xf32, #tpu.memory_space<vmem>>, vector<64x32xf32>
    %c0_53 = arith.constant 0 : index
    %c0_54 = arith.constant 0 : index
    %187 = vector.load %arg5[%c0_53, %c0_54] : memref<32x128xf32, #tpu.memory_space<vmem>>, vector<32x128xf32>
    %cst_55 = arith.constant dense<0.000000e+00> : vector<64x128xf32>
    %188 = tpu.matmul %186, %187, %cst_55 {dimension_numbers = #tpu.dot_dimension_numbers<[1], [0], [0], [1], [0, 0, 1, 1], [], []>} : vector<64x32xf32>, vector<32x128xf32>, vector<64x128xf32> -> vector<64x128xf32>
    %c0_56 = arith.constant 0 : index
    %c0_57 = arith.constant 0 : index
    %189 = vector.load %arg6[%c0_56, %c0_57] : memref<1x128xf32, #tpu.memory_space<vmem>>, vector<1x128xf32>
    %190 = vector.broadcast %189 : vector<1x128xf32> to vector<64x128xf32>
    %191 = arith.addf %188, %190 : vector<64x128xf32>
    %c0_58 = arith.constant 0 : index
    %c0_59 = arith.constant 0 : index
    %192 = vector.load %arg7[%c0_58, %c0_59] : memref<64x128xf32, #tpu.memory_space<vmem>>, vector<64x128xf32>
    tpu.vector_store %arg7[%c0_58, %c0_59], %191 {strides = array<i32>} : memref<64x128xf32, #tpu.memory_space<vmem>>, vector<64x128xf32>,
    %c0_60 = arith.constant 0 : index
    %c0_61 = arith.constant 0 : index
    %193 = vector.load %arg8[%c0_60, %c0_61] : memref<8x32xf32, #tpu.memory_space<vmem>>, vector<8x32xf32>
    tpu.vector_store %arg8[%c0_60, %c0_61], %183 {strides = array<i32>} : memref<8x32xf32, #tpu.memory_space<vmem>>, vector<8x32xf32>,
    %c0_62 = arith.constant 0 : index
    %c0_63 = arith.constant 0 : index
    %194 = vector.load %arg9[%c0_62, %c0_63] : memref<8x32xf32, #tpu.memory_space<vmem>>, vector<8x32xf32>
    tpu.vector_store %arg9[%c0_62, %c0_63], %181 {strides = array<i32>} : memref<8x32xf32, #tpu.memory_space<vmem>>, vector<8x32xf32>,
    return
  }
  func.func @transform_0(%arg0: i32) -> (i32, i32) {
    %c0_i32 = arith.constant 0 : i32
    %c0_i32_0 = arith.constant 0 : i32
    %c0_i32_1 = arith.constant 0 : i32
    return %c0_i32, %c0_i32_0 : i32, i32
  }
  func.func @transform_1(%arg0: i32) -> (i32, i32) {
    %c0_i32 = arith.constant 0 : i32
    %c0_i32_0 = arith.constant 0 : i32
    %c0_i32_1 = arith.constant 0 : i32
    return %c0_i32, %c0_i32_0 : i32, i32
  }
  func.func @transform_2(%arg0: i32) -> (i32, i32) {
    %c0_i32 = arith.constant 0 : i32
    %c0_i32_0 = arith.constant 0 : i32
    %c0_i32_1 = arith.constant 0 : i32
    return %c0_i32, %c0_i32_0 : i32, i32
  }
  func.func @transform_3(%arg0: i32) -> (i32, i32) {
    %c0_i32 = arith.constant 0 : i32
    %c0_i32_0 = arith.constant 0 : i32
    %c0_i32_1 = arith.constant 0 : i32
    return %c0_i32, %c0_i32_0 : i32, i32
  }
  func.func @transform_4(%arg0: i32) -> (i32, i32) {
    %c0_i32 = arith.constant 0 : i32
    %c0_i32_0 = arith.constant 0 : i32
    %c0_i32_1 = arith.constant 0 : i32
    return %c0_i32, %c0_i32_0 : i32, i32
  }
  func.func @transform_5(%arg0: i32) -> (i32, i32) {
    %c0_i32 = arith.constant 0 : i32
    %c0_i32_0 = arith.constant 0 : i32
    %c0_i32_1 = arith.constant 0 : i32
    return %c0_i32, %c0_i32_0 : i32, i32
  }
  func.func @transform_6(%arg0: i32) -> (i32, i32) {
    %c0_i32 = arith.constant 0 : i32
    %c0_i32_0 = arith.constant 0 : i32
    %c0_i32_1 = arith.constant 0 : i32
    return %c0_i32, %c0_i32_0 : i32, i32
  }
  func.func @transform_7(%arg0: i32) -> (i32, i32) {
    %c0_i32 = arith.constant 0 : i32
    %c0_i32_0 = arith.constant 0 : i32
    %c0_i32_1 = arith.constant 0 : i32
    return %c0_i32, %c0_i32_0 : i32, i32
  }
  func.func @transform_8(%arg0: i32) -> (i32, i32) {
    %c0_i32 = arith.constant 0 : i32
    %c0_i32_0 = arith.constant 0 : i32
    %c0_i32_1 = arith.constant 0 : i32
    return %c0_i32, %c0_i32_0 : i32, i32
  }
}

</mosaic_0001>

<llo_original>
// kernel: tpu_custom_call.1
$region0: #{tpu_custom_call.1}
  #allocation0 [shape = 'u32[]', space=smem, size = 0x4, offset = 0x4, fixed_abs, tag = 'smem constant byte address 0x4 - core index']
  #allocation1 [shape = 'u32[144,128]{1,0:T(1,128)}', space=vmem, size = 0x12000, scoped, tag = 'internal scratch']
  #allocation2 [shape = 'f32[64,128]{1,0:T(8,128)}', space=vmem, size = 0x8000, scoped, tag = 'scratch operand']
  #allocation3 [shape = 'f32[64,32]{1,0:T(8,128)}', space=vmem, size = 0x8000, scoped, tag = 'scratch operand']
  %s0 = inlined_call_operand.vmem [shape: f32[64,39], index: 0, kind: input, shape index: {}]
  %s1 = inlined_call_operand.vmem [shape: f32[39,128], index: 1, kind: input, shape index: {}]
  %s2 = inlined_call_operand.vmem [shape: f32[32,128], index: 2, kind: input, shape index: {}]
  %s3 = inlined_call_operand.vmem [shape: f32[1,128], index: 3, kind: input, shape index: {}]
  %s4 = inlined_call_operand.vmem [shape: f32[32,128], index: 4, kind: input, shape index: {}]
  %s5 = inlined_call_operand.vmem [shape: f32[1,128], index: 5, kind: input, shape index: {}]
  %s6 = inlined_call_operand.hbm [shape: f32[64,128], index: 6, kind: output, shape index: {0}]
  %s7 = inlined_call_operand.hbm [shape: f32[8,32], index: 7, kind: output, shape index: {1}]
  %s8 = inlined_call_operand.hbm [shape: f32[8,32], index: 8, kind: output, shape index: {2}]
  %9 = xla_tuple %s6, %s7, %s8
  %s10 = sld [smem:[#allocation0]]
  $region50: #{tpu_custom_call.1} parent=0
    _
  %s12 = ssub.s32 1, %s10
  %s13 = scalar_select 0, %s12, %s10
  $region1: #{tpu_custom_call.1} parent=0
    #allocation4 [shape = 'u8[32768]{0}', space=vmem, size = 0x8000, scoped, tag = 'output window, operand 0, single buffered']
    #allocation5 [shape = 's32[1]{0}', space=sflag, size = 0x4, scoped, tag = 'scoped memory for tpu_custom_call.1']
    #allocation6 [shape = 'u8[4096]{0}', space=vmem, size = 0x1000, scoped, tag = 'output window, operand 1, single buffered']
    #allocation7 [shape = 's32[1]{0}', space=sflag, size = 0x4, scoped, tag = 'scoped memory for tpu_custom_call.1']
    #allocation8 [shape = 'u8[4096]{0}', space=vmem, size = 0x1000, scoped, tag = 'output window, operand 2, single buffered']
    %14 = vsyncpa [#allocation5], 0
    %15 = vsyncpa [#allocation7], 0
    // Predicated region
    $region2: #{tpu_custom_call.1} parent=1 // pred_check
      _
    $region3: #{tpu_custom_call.1} parent=1 // pred_check_branch
      %17 = sbr.rel (0) target = $region5
    $region4: #{tpu_custom_call.1} parent=1 // pred_region
      _
    $region5: #{tpu_custom_call.1} parent=1 // pred_fallthru
      _
    // Predicated region
    $region6: #{tpu_custom_call.1} parent=1 // pred_check
      _
    $region7: #{tpu_custom_call.1} parent=1 // pred_check_branch
      %19 = sbr.rel (0) target = $region9
    $region8: #{tpu_custom_call.1} parent=1 // pred_region
      _
    $region9: #{tpu_custom_call.1} parent=1 // pred_fallthru
      _
    // Predicated region
    $region10: #{tpu_custom_call.1} parent=1 // pred_check
      _
    $region11: #{tpu_custom_call.1} parent=1 // pred_check_branch
      %21 = sbr.rel (0) target = $region13
    $region12: #{tpu_custom_call.1} parent=1 // pred_region
      _
    $region13: #{tpu_custom_call.1} parent=1 // pred_fallthru
      _
    // Predicated region
    $region14: #{tpu_custom_call.1} parent=1 // pred_check
      _
    $region15: #{tpu_custom_call.1} parent=1 // pred_check_branch
      %23 = sbr.rel (0) target = $region17
    $region16: #{tpu_custom_call.1} parent=1 // pred_region
      _
    $region17: #{tpu_custom_call.1} parent=1 // pred_fallthru
      _
    // Predicated region
    $region18: #{tpu_custom_call.1} parent=1 // pred_check
      _
    $region19: #{tpu_custom_call.1} parent=1 // pred_check_branch
      %25 = sbr.rel (0) target = $region21
    $region20: #{tpu_custom_call.1} parent=1 // pred_region
      _
    $region21: #{tpu_custom_call.1} parent=1 // pred_fallthru
      _
    // Predicated region
    $region22: #{tpu_custom_call.1} parent=1 // pred_check
      _
    $region23: #{tpu_custom_call.1} parent=1 // pred_check_branch
      %27 = sbr.rel (0) target = $region25
    $region24: #{tpu_custom_call.1} parent=1 // pred_region
      _
    $region25: #{tpu_custom_call.1} parent=1 // pred_fallthru
      _
    %v28 = vld [vmem:[%s0] sm:$0xff]
    %v29 = vld [vmem:[%s0 + $0x8] sm:$0xff]
    %v30 = vld [vmem:[%s0 + $0x10] sm:$0xff]
    %v31 = vld [vmem:[%s0 + $0x18] sm:$0xff]
    %v32 = vld [vmem:[%s0 + $0x20] sm:$0xff]
    %v33 = vld [vmem:[%s0 + $0x28] sm:$0xff]
    %v34 = vld [vmem:[%s0 + $0x30] sm:$0xff]
    %v35 = vld [vmem:[%s0 + $0x38] sm:$0xff]
    %v36 = vld [vmem:[%s1] sm:$0xff]
    %v37 = vld [vmem:[%s1 + $0x8] sm:$0xff]
    %v38 = vld [vmem:[%s1 + $0x10] sm:$0xff]
    %v39 = vld [vmem:[%s1 + $0x18] sm:$0xff]
    %v40 = vld [vmem:[%s1 + $0x20] sm:$0x7f]
    %v41 = vld [vmem:[%s3] sm:$0x1]
    %v43 = vlaneseq
    %v44 = vshrl.u32 %v43, 7
    %v45 = vsub.s32 0, %v44
    %v46 = vrot.slane %v41, %v45
    %vm48 = vcmask 318464
    %v50 = vsel %vm48, %v28, 0
    %v53 = vsel %vm48, %v29, 0
    %v56 = vsel %vm48, %v30, 0
    %v59 = vsel %vm48, %v31, 0
    %v62 = vsel %vm48, %v32, 0
    %v65 = vsel %vm48, %v33, 0
    %v68 = vsel %vm48, %v34, 0
    %v71 = vsel %vm48, %v35, 0
    %vm73 = vcmask 1046528
    %v75 = vsel %vm73, %v40, 0
    %77 = vmatprep.subr.mxu0 0.0
    %78 = vmatpush1.msra.mxu0 0.0
    %79 = vmatprep.subr.mxu0 0.0
    %80 = vmatpush1.msra.mxu0 0.0
    %81 = vmatprep.subr.mxu0 0.0
    %82 = vmatpush1.msra.mxu0 0.0
    %83 = vmatprep.subr.mxu0 0.0
    %84 = vmatpush1.msra.mxu0 0.0
    %85 = vmatprep.subr.mxu0 0.0
    %86 = vmatpush1.msra.mxu0 0.0
    %87 = vmatprep.subr.mxu0 0.0
    %88 = vmatpush1.msra.mxu0 0.0
    %89 = vmatprep.subr.mxu0 0.0
    %90 = vmatpush1.msra.mxu0 0.0
    %91 = vmatprep.subr.mxu0 0.0
    %92 = vmatpush1.msra.mxu0 0.0
    %93 = vmatprep.subr.mxu0 0.0
    %94 = vmatpush1.msra.mxu0 0.0
    %95 = vmatprep.subr.mxu0 0.0
    %96 = vmatpush1.msra.mxu0 0.0
    %97 = vmatprep.subr.mxu0 0.0
    %98 = vmatpush1.msra.mxu0 0.0
    %99 = vmatprep.subr.mxu0 0.0
    %100 = vmatpush1.msra.mxu0 %v75
    %101 = vmatprep.subr.mxu0 0.0
    %102 = vmatpush1.msra.mxu0 %v39
    %103 = vmatprep.subr.mxu0 0.0
    %104 = vmatpush1.msra.mxu0 %v38
    %105 = vmatprep.subr.mxu0 0.0
    %106 = vmatpush1.msra.mxu0 %v37
    %107 = vmatprep.subr.mxu0 0.0
    %108 = vmatpush1.msra.mxu0 %v36
    %109 = vmatprep.subr.mxu0 0.0
    %110 = vmatpush2.msra.mxu0 0.0
    %111 = vmatprep.subr.mxu0 0.0
    %112 = vmatpush2.msra.mxu0 0.0
    %113 = vmatprep.subr.mxu0 0.0
    %114 = vmatpush2.msra.mxu0 0.0
    %115 = vmatprep.subr.mxu0 0.0
    %116 = vmatpush2.msra.mxu0 0.0
    %117 = vmatprep.subr.mxu0 0.0
    %118 = vmatpush2.msra.mxu0 0.0
    %119 = vmatprep.subr.mxu0 0.0
    %120 = vmatpush2.msra.mxu0 0.0
    %121 = vmatprep.subr.mxu0 0.0
    %122 = vmatpush2.msra.mxu0 0.0
    %123 = vmatprep.subr.mxu0 0.0
    %124 = vmatpush2.msra.mxu0 0.0
    %125 = vmatprep.subr.mxu0 0.0
    %126 = vmatpush2.msra.mxu0 0.0
    %127 = vmatprep.subr.mxu0 0.0
    %128 = vmatpush2.msra.mxu0 0.0
    %129 = vmatprep.subr.mxu0 0.0
    %130 = vmatpush2.msra.mxu0 0.0
    %131 = vmatprep.subr.mxu0 0.0
    %132 = vmatpush2.msra.mxu0 0.0
    %133 = vmatprep.subr.mxu0 0.0
    %134 = vmatpush2.msra.mxu0 0.0
    %135 = vmatprep.subr.mxu0 0.0
    %136 = vmatpush2.msra.mxu0 0.0
    %137 = vmatprep.subr.mxu0 0.0
    %138 = vmatpush2.msra.mxu0 0.0
    %139 = vmatprep.subr.mxu0 0.0
    %140 = vmatpush2.msra.mxu0 0.0
    %141 = vmatprep.mubr.f32.mxu0 0.0
    %142 = vmatmul.mubr.f32.gmra.mxu0 %v50
    %v143 = vpop.f32.mrf.mxu0
    %v144 = vadd.f32 %v46, %v143
    %v145 = vpop.f32.mrf.mxu0
    %146 = vmatprep.mubr.f32.mxu0 0.0
    %147 = vmatmul.mubr.f32.gmra.mxu0 %v53
    %v148 = vpop.f32.mrf.mxu0
    %v149 = vadd.f32 %v46, %v148
    %v150 = vpop.f32.mrf.mxu0
    %151 = vmatprep.mubr.f32.mxu0 0.0
    %152 = vmatmul.mubr.f32.gmra.mxu0 %v56
    %v153 = vpop.f32.mrf.mxu0
    %v154 = vadd.f32 %v46, %v153
    %v155 = vpop.f32.mrf.mxu0
    %156 = vmatprep.mubr.f32.mxu0 0.0
    %157 = vmatmul.mubr.f32.gmra.mxu0 %v59
    %v158 = vpop.f32.mrf.mxu0
    %v159 = vadd.f32 %v46, %v158
    %v160 = vpop.f32.mrf.mxu0
    %161 = vmatprep.mubr.f32.mxu0 0.0
    %162 = vmatmul.mubr.f32.gmra.mxu0 %v62
    %v163 = vpop.f32.mrf.mxu0
    %v164 = vadd.f32 %v46, %v163
    %v165 = vpop.f32.mrf.mxu0
    %166 = vmatprep.mubr.f32.mxu0 0.0
    %167 = vmatmul.mubr.f32.gmra.mxu0 %v65
    %v168 = vpop.f32.mrf.mxu0
    %v169 = vadd.f32 %v46, %v168
    %v170 = vpop.f32.mrf.mxu0
    %171 = vmatprep.mubr.f32.mxu0 0.0
    %172 = vmatmul.mubr.f32.gmra.mxu0 %v68
    %v173 = vpop.f32.mrf.mxu0
    %v174 = vadd.f32 %v46, %v173
    %v175 = vpop.f32.mrf.mxu0
    %176 = vmatprep.mubr.f32.mxu0 0.0
    %177 = vmatmul.mubr.f32.gmra.mxu0 %v71
    %v178 = vpop.f32.mrf.mxu0
    %v179 = vadd.f32 %v46, %v178
    %v180 = vpop.f32.mrf.mxu0
    %181 = vdwg.mxu0
    %182 = vst [vmem:[#allocation2] sm:$0xff] %v144
    %183 = vst [vmem:[#allocation2 + $0x8] sm:$0xff] %v149
    %184 = vst [vmem:[#allocation2 + $0x10] sm:$0xff] %v154
    %185 = vst [vmem:[#allocation2 + $0x18] sm:$0xff] %v159
    %186 = vst [vmem:[#allocation2 + $0x20] sm:$0xff] %v164
    %187 = vst [vmem:[#allocation2 + $0x28] sm:$0xff] %v169
    %188 = vst [vmem:[#allocation2 + $0x30] sm:$0xff] %v174
    %189 = vst [vmem:[#allocation2 + $0x38] sm:$0xff] %v179
    %v190 = vld [vmem:[%s2] sm:$0xff]
    %v191 = vld [vmem:[%s2 + $0x8] sm:$0xff]
    %v192 = vld [vmem:[%s2 + $0x10] sm:$0xff]
    %v193 = vld [vmem:[%s2 + $0x18] sm:$0xff]
    %v194 = vld [vmem:[#allocation2] sm:$0xff]
    %vm195 = vcmask 261120
    %v197 = vsel %vm195, 0.0, 0
    %199 = vmatprep.subr.mxu0 0.0
    %200 = vmatpush1.msra.mxu0 0.0
    %201 = vmatprep.subr.mxu0 0.0
    %202 = vmatpush1.msra.mxu0 0.0
    %203 = vmatprep.subr.mxu0 0.0
    %204 = vmatpush1.msra.mxu0 0.0
    %205 = vmatprep.subr.mxu0 0.0
    %206 = vmatpush1.msra.mxu0 0.0
    %207 = vmatprep.subr.mxu0 0.0
    %208 = vmatpush1.msra.mxu0 0.0
    %209 = vmatprep.subr.mxu0 0.0
    %210 = vmatpush1.msra.mxu0 0.0
    %211 = vmatprep.subr.mxu0 0.0
    %212 = vmatpush1.msra.mxu0 0.0
    %213 = vmatprep.subr.mxu0 0.0
    %214 = vmatpush1.msra.mxu0 0.0
    %215 = vmatprep.subr.mxu0 0.0
    %216 = vmatpush1.msra.mxu0 0.0
    %217 = vmatprep.subr.mxu0 0.0
    %218 = vmatpush1.msra.mxu0 0.0
    %219 = vmatprep.subr.mxu0 0.0
    %220 = vmatpush1.msra.mxu0 0.0
    %221 = vmatprep.subr.mxu0 0.0
    %222 = vmatpush1.msra.mxu0 0.0
    %223 = vmatprep.subr.mxu0 0.0
    %224 = vmatpush1.msra.mxu0 %v193
    %225 = vmatprep.subr.mxu0 0.0
    %226 = vmatpush1.msra.mxu0 %v192
    %227 = vmatprep.subr.mxu0 0.0
    %228 = vmatpush1.msra.mxu0 %v191
    %229 = vmatprep.subr.mxu0 0.0
    %230 = vmatpush1.msra.mxu0 %v190
    %231 = vmatprep.subr.mxu0 0.0
    %232 = vmatpush2.msra.mxu0 0.0
    %233 = vmatprep.subr.mxu0 0.0
    %234 = vmatpush2.msra.mxu0 0.0
    %235 = vmatprep.subr.mxu0 0.0
    %236 = vmatpush2.msra.mxu0 0.0
    %237 = vmatprep.subr.mxu0 0.0
    %238 = vmatpush2.msra.mxu0 0.0
    %239 = vmatprep.subr.mxu0 0.0
    %240 = vmatpush2.msra.mxu0 0.0
    %241 = vmatprep.subr.mxu0 0.0
    %242 = vmatpush2.msra.mxu0 0.0
    %243 = vmatprep.subr.mxu0 0.0
    %244 = vmatpush2.msra.mxu0 0.0
    %245 = vmatprep.subr.mxu0 0.0
    %246 = vmatpush2.msra.mxu0 0.0
    %247 = vmatprep.subr.mxu0 0.0
    %248 = vmatpush2.msra.mxu0 0.0
    %249 = vmatprep.subr.mxu0 0.0
    %250 = vmatpush2.msra.mxu0 0.0
    %251 = vmatprep.subr.mxu0 0.0
    %252 = vmatpush2.msra.mxu0 0.0
    %253 = vmatprep.subr.mxu0 0.0
    %254 = vmatpush2.msra.mxu0 0.0
    %255 = vmatprep.subr.mxu0 0.0
    %256 = vmatpush2.msra.mxu0 0.0
    %257 = vmatprep.subr.mxu0 0.0
    %258 = vmatpush2.msra.mxu0 0.0
    %259 = vmatprep.subr.mxu0 0.0
    %260 = vmatpush2.msra.mxu0 0.0
    %261 = vmatprep.subr.mxu0 0.0
    %262 = vmatpush2.msra.mxu0 0.0
    %263 = vmatprep.mubr.f32.mxu0 0.0
    %264 = vmatmul.mubr.f32.gmra.mxu0 %v197
    %v265 = vpop.f32.mrf.mxu0
    %v266 = vadd.f32 0.0, %v265
    %v267 = vpop.f32.mrf.mxu0
    %268 = vdwg.mxu0
    %v269 = vadd.f32 %v194, %v266
    %v270 = vxor.u32 %v269, 2147483648
    %v271 = vmul.f32 %v270, 1.442695
    %v272 = vpow.pop %v271
    %v273 = vadd.f32 %v272, 1.0
    %v274 = vrcp.pop %v273
    %v275 = vmul.f32 1.0, %v274
    %v276 = vtanh.pop %v269
    %v277 = vmul.f32 %v275, 0.0
    %279 = vrot.lane.b32.xlu0 %v276, 64
    %v280 = vpop.permute.xlu0 %279
    %v282 = vmul.f32 %v275, %v280
    %284 = vrot.lane.b32.xlu0 %v282, 32
    %v285 = vpop.permute.xlu0 %284
    %v287 = vadd.f32 %v277, %v285
    %v288 = vtanh.pop %v287
    %290 = vrot.lane.b32.xlu0 %v288, 64
    %v291 = vpop.permute.xlu0 %290
    %v293 = vmul.f32 %v275, %v291
    %295 = vrot.lane.b32.xlu0 %v293, 32
    %v296 = vpop.permute.xlu0 %295
    %298 = vst.msk [vmem:[#allocation3] sm:$0xff] %vm195, %v296
    %v299 = vld [vmem:[#allocation2 + $0x8] sm:$0xff]
    %v300 = vsel %vm195, %v296, 0
    %302 = vmatprep.subr.mxu0 0.0
    %303 = vmatpush1.msra.mxu0 0.0
    %304 = vmatprep.subr.mxu0 0.0
    %305 = vmatpush1.msra.mxu0 0.0
    %306 = vmatprep.subr.mxu0 0.0
    %307 = vmatpush1.msra.mxu0 0.0
    %308 = vmatprep.subr.mxu0 0.0
    %309 = vmatpush1.msra.mxu0 0.0
    %310 = vmatprep.subr.mxu0 0.0
    %311 = vmatpush1.msra.mxu0 0.0
    %312 = vmatprep.subr.mxu0 0.0
    %313 = vmatpush1.msra.mxu0 0.0
    %314 = vmatprep.subr.mxu0 0.0
    %315 = vmatpush1.msra.mxu0 0.0
    %316 = vmatprep.subr.mxu0 0.0
    %317 = vmatpush1.msra.mxu0 0.0
    %318 = vmatprep.subr.mxu0 0.0
    %319 = vmatpush1.msra.mxu0 0.0
    %320 = vmatprep.subr.mxu0 0.0
    %321 = vmatpush1.msra.mxu0 0.0
    %322 = vmatprep.subr.mxu0 0.0
    %323 = vmatpush1.msra.mxu0 0.0
    %324 = vmatprep.subr.mxu0 0.0
    %325 = vmatpush1.msra.mxu0 0.0
    %326 = vmatprep.subr.mxu0 0.0
    %327 = vmatpush1.msra.mxu0 %v193
    %328 = vmatprep.subr.mxu0 0.0
    %329 = vmatpush1.msra.mxu0 %v192
    %330 = vmatprep.subr.mxu0 0.0
    %331 = vmatpush1.msra.mxu0 %v191
    %332 = vmatprep.subr.mxu0 0.0
    %333 = vmatpush1.msra.mxu0 %v190
    %334 = vmatprep.subr.mxu0 0.0
    %335 = vmatpush2.msra.mxu0 0.0
    %336 = vmatprep.subr.mxu0 0.0
    %337 = vmatpush2.msra.mxu0 0.0
    %338 = vmatprep.subr.mxu0 0.0
    %339 = vmatpush2.msra.mxu0 0.0
    %340 = vmatprep.subr.mxu0 0.0
    %341 = vmatpush2.msra.mxu0 0.0
    %342 = vmatprep.subr.mxu0 0.0
    %343 = vmatpush2.msra.mxu0 0.0
    %344 = vmatprep.subr.mxu0 0.0
    %345 = vmatpush2.msra.mxu0 0.0
    %346 = vmatprep.subr.mxu0 0.0
    %347 = vmatpush2.msra.mxu0 0.0
    %348 = vmatprep.subr.mxu0 0.0
    %349 = vmatpush2.msra.mxu0 0.0
    %350 = vmatprep.subr.mxu0 0.0
    %351 = vmatpush2.msra.mxu0 0.0
    %352 = vmatprep.subr.mxu0 0.0
    %353 = vmatpush2.msra.mxu0 0.0
    %354 = vmatprep.subr.mxu0 0.0
    %355 = vmatpush2.msra.mxu0 0.0
    %356 = vmatprep.subr.mxu0 0.0
    %357 = vmatpush2.msra.mxu0 0.0
    %358 = vmatprep.subr.mxu0 0.0
    %359 = vmatpush2.msra.mxu0 0.0
    %360 = vmatprep.subr.mxu0 0.0
    %361 = vmatpush2.msra.mxu0 0.0
    %362 = vmatprep.subr.mxu0 0.0
    %363 = vmatpush2.msra.mxu0 0.0
    %364 = vmatprep.subr.mxu0 0.0
    %365 = vmatpush2.msra.mxu0 0.0
    %366 = vmatprep.mubr.f32.mxu0 0.0
    %367 = vmatmul.mubr.f32.gmra.mxu0 %v300
    %v368 = vpop.f32.mrf.mxu0
    %v369 = vadd.f32 0.0, %v368
    %v370 = vpop.f32.mrf.mxu0
    %371 = vdwg.mxu0
    %v372 = vadd.f32 %v299, %v369
    %v373 = vxor.u32 %v372, 2147483648
    %v374 = vmul.f32 %v373, 1.442695
    %v375 = vpow.pop %v374
    %v376 = vadd.f32 %v375, 1.0
    %v377 = vrcp.pop %v376
    %v378 = vmul.f32 1.0, %v377
    %v379 = vtanh.pop %v372
    %v380 = vmul.f32 %v378, %v287
    %382 = vrot.lane.b32.xlu0 %v379, 64
    %v383 = vpop.permute.xlu0 %382
    %v385 = vmul.f32 %v378, %v383
    %387 = vrot.lane.b32.xlu0 %v385, 32
    %v388 = vpop.permute.xlu0 %387
    %v390 = vadd.f32 %v380, %v388
    %v391 = vtanh.pop %v390
    %393 = vrot.lane.b32.xlu0 %v391, 64
    %v394 = vpop.permute.xlu0 %393
    %v396 = vmul.f32 %v378, %v394
    %398 = vrot.lane.b32.xlu0 %v396, 32
    %v399 = vpop.permute.xlu0 %398
    %401 = vst.msk [vmem:[#allocation3 + $0x8] sm:$0xff] %vm195, %v399
    %v402 = vld [vmem:[#allocation2 + $0x10] sm:$0xff]
    %v403 = vsel %vm195, %v399, 0
    %405 = vmatprep.subr.mxu0 0.0
    %406 = vmatpush1.msra.mxu0 0.0
    %407 = vmatprep.subr.mxu0 0.0
    %408 = vmatpush1.msra.mxu0 0.0
    %409 = vmatprep.subr.mxu0 0.0
    %410 = vmatpush1.msra.mxu0 0.0
    %411 = vmatprep.subr.mxu0 0.0
    %412 = vmatpush1.msra.mxu0 0.0
    %413 = vmatprep.subr.mxu0 0.0
    %414 = vmatpush1.msra.mxu0 0.0
    %415 = vmatprep.subr.mxu0 0.0
    %416 = vmatpush1.msra.mxu0 0.0
    %417 = vmatprep.subr.mxu0 0.0
    %418 = vmatpush1.msra.mxu0 0.0
    %419 = vmatprep.subr.mxu0 0.0
    %420 = vmatpush1.msra.mxu0 0.0
    %421 = vmatprep.subr.mxu0 0.0
    %422 = vmatpush1.msra.mxu0 0.0
    %423 = vmatprep.subr.mxu0 0.0
    %424 = vmatpush1.msra.mxu0 0.0
    %425 = vmatprep.subr.mxu0 0.0
    %426 = vmatpush1.msra.mxu0 0.0
    %427 = vmatprep.subr.mxu0 0.0
    %428 = vmatpush1.msra.mxu0 0.0
    %429 = vmatprep.subr.mxu0 0.0
    %430 = vmatpush1.msra.mxu0 %v193
    %431 = vmatprep.subr.mxu0 0.0
    %432 = vmatpush1.msra.mxu0 %v192
    %433 = vmatprep.subr.mxu0 0.0
    %434 = vmatpush1.msra.mxu0 %v191
    %435 = vmatprep.subr.mxu0 0.0
    %436 = vmatpush1.msra.mxu0 %v190
    %437 = vmatprep.subr.mxu0 0.0
    %438 = vmatpush2.msra.mxu0 0.0
    %439 = vmatprep.subr.mxu0 0.0
    %440 = vmatpush2.msra.mxu0 0.0
    %441 = vmatprep.subr.mxu0 0.0
    %442 = vmatpush2.msra.mxu0 0.0
    %443 = vmatprep.subr.mxu0 0.0
    %444 = vmatpush2.msra.mxu0 0.0
    %445 = vmatprep.subr.mxu0 0.0
    %446 = vmatpush2.msra.mxu0 0.0
    %447 = vmatprep.subr.mxu0 0.0
    %448 = vmatpush2.msra.mxu0 0.0
    %449 = vmatprep.subr.mxu0 0.0
    %450 = vmatpush2.msra.mxu0 0.0
    %451 = vmatprep.subr.mxu0 0.0
    %452 = vmatpush2.msra.mxu0 0.0
    %453 = vmatprep.subr.mxu0 0.0
    %454 = vmatpush2.msra.mxu0 0.0
    %455 = vmatprep.subr.mxu0 0.0
    %456 = vmatpush2.msra.mxu0 0.0
    %457 = vmatprep.subr.mxu0 0.0
    %458 = vmatpush2.msra.mxu0 0.0
    %459 = vmatprep.subr.mxu0 0.0
    %460 = vmatpush2.msra.mxu0 0.0
    %461 = vmatprep.subr.mxu0 0.0
    %462 = vmatpush2.msra.mxu0 0.0
    %463 = vmatprep.subr.mxu0 0.0
    %464 = vmatpush2.msra.mxu0 0.0
    %465 = vmatprep.subr.mxu0 0.0
    %466 = vmatpush2.msra.mxu0 0.0
    %467 = vmatprep.subr.mxu0 0.0
    %468 = vmatpush2.msra.mxu0 0.0
    %469 = vmatprep.mubr.f32.mxu0 0.0
    %470 = vmatmul.mubr.f32.gmra.mxu0 %v403
    %v471 = vpop.f32.mrf.mxu0
    %v472 = vadd.f32 0.0, %v471
    %v473 = vpop.f32.mrf.mxu0
    %474 = vdwg.mxu0
    %v475 = vadd.f32 %v402, %v472
    %v476 = vxor.u32 %v475, 2147483648
    %v477 = vmul.f32 %v476, 1.442695
    %v478 = vpow.pop %v477
    %v479 = vadd.f32 %v478, 1.0
    %v480 = vrcp.pop %v479
    %v481 = vmul.f32 1.0, %v480
    %v482 = vtanh.pop %v475
    %v483 = vmul.f32 %v481, %v390
    %485 = vrot.lane.b32.xlu0 %v482, 64
    %v486 = vpop.permute.xlu0 %485
    %v488 = vmul.f32 %v481, %v486
    %490 = vrot.lane.b32.xlu0 %v488, 32
    %v491 = vpop.permute.xlu0 %490
    %v493 = vadd.f32 %v483, %v491
    %v494 = vtanh.pop %v493
    %496 = vrot.lane.b32.xlu0 %v494, 64
    %v497 = vpop.permute.xlu0 %496
    %v499 = vmul.f32 %v481, %v497
    %501 = vrot.lane.b32.xlu0 %v499, 32
    %v502 = vpop.permute.xlu0 %501
    %504 = vst.msk [vmem:[#allocation3 + $0x10] sm:$0xff] %vm195, %v502
    %v505 = vld [vmem:[#allocation2 + $0x18] sm:$0xff]
    %v506 = vsel %vm195, %v502, 0
    %508 = vmatprep.subr.mxu0 0.0
    %509 = vmatpush1.msra.mxu0 0.0
    %510 = vmatprep.subr.mxu0 0.0
    %511 = vmatpush1.msra.mxu0 0.0
    %512 = vmatprep.subr.mxu0 0.0
    %513 = vmatpush1.msra.mxu0 0.0
    %514 = vmatprep.subr.mxu0 0.0
    %515 = vmatpush1.msra.mxu0 0.0
    %516 = vmatprep.subr.mxu0 0.0
    %517 = vmatpush1.msra.mxu0 0.0
    %518 = vmatprep.subr.mxu0 0.0
    %519 = vmatpush1.msra.mxu0 0.0
    %520 = vmatprep.subr.mxu0 0.0
    %521 = vmatpush1.msra.mxu0 0.0
    %522 = vmatprep.subr.mxu0 0.0
    %523 = vmatpush1.msra.mxu0 0.0
    %524 = vmatprep.subr.mxu0 0.0
    %525 = vmatpush1.msra.mxu0 0.0
    %526 = vmatprep.subr.mxu0 0.0
    %527 = vmatpush1.msra.mxu0 0.0
    %528 = vmatprep.subr.mxu0 0.0
    %529 = vmatpush1.msra.mxu0 0.0
    %530 = vmatprep.subr.mxu0 0.0
    %531 = vmatpush1.msra.mxu0 0.0
    %532 = vmatprep.subr.mxu0 0.0
    %533 = vmatpush1.msra.mxu0 %v193
    %534 = vmatprep.subr.mxu0 0.0
    %535 = vmatpush1.msra.mxu0 %v192
    %536 = vmatprep.subr.mxu0 0.0
    %537 = vmatpush1.msra.mxu0 %v191
    %538 = vmatprep.subr.mxu0 0.0
    %539 = vmatpush1.msra.mxu0 %v190
    %540 = vmatprep.subr.mxu0 0.0
    %541 = vmatpush2.msra.mxu0 0.0
    %542 = vmatprep.subr.mxu0 0.0
    %543 = vmatpush2.msra.mxu0 0.0
    %544 = vmatprep.subr.mxu0 0.0
    %545 = vmatpush2.msra.mxu0 0.0
    %546 = vmatprep.subr.mxu0 0.0
    %547 = vmatpush2.msra.mxu0 0.0
    %548 = vmatprep.subr.mxu0 0.0
    %549 = vmatpush2.msra.mxu0 0.0
    %550 = vmatprep.subr.mxu0 0.0
    %551 = vmatpush2.msra.mxu0 0.0
    %552 = vmatprep.subr.mxu0 0.0
    %553 = vmatpush2.msra.mxu0 0.0
    %554 = vmatprep.subr.mxu0 0.0
    %555 = vmatpush2.msra.mxu0 0.0
    %556 = vmatprep.subr.mxu0 0.0
    %557 = vmatpush2.msra.mxu0 0.0
    %558 = vmatprep.subr.mxu0 0.0
    %559 = vmatpush2.msra.mxu0 0.0
    %560 = vmatprep.subr.mxu0 0.0
    %561 = vmatpush2.msra.mxu0 0.0
    %562 = vmatprep.subr.mxu0 0.0
    %563 = vmatpush2.msra.mxu0 0.0
    %564 = vmatprep.subr.mxu0 0.0
    %565 = vmatpush2.msra.mxu0 0.0
    %566 = vmatprep.subr.mxu0 0.0
    %567 = vmatpush2.msra.mxu0 0.0
    %568 = vmatprep.subr.mxu0 0.0
    %569 = vmatpush2.msra.mxu0 0.0
    %570 = vmatprep.subr.mxu0 0.0
    %571 = vmatpush2.msra.mxu0 0.0
    %572 = vmatprep.mubr.f32.mxu0 0.0
    %573 = vmatmul.mubr.f32.gmra.mxu0 %v506
    %v574 = vpop.f32.mrf.mxu0
    %v575 = vadd.f32 0.0, %v574
    %v576 = vpop.f32.mrf.mxu0
    %577 = vdwg.mxu0
    %v578 = vadd.f32 %v505, %v575
    %v579 = vxor.u32 %v578, 2147483648
    %v580 = vmul.f32 %v579, 1.442695
    %v581 = vpow.pop %v580
    %v582 = vadd.f32 %v581, 1.0
    %v583 = vrcp.pop %v582
    %v584 = vmul.f32 1.0, %v583
    %v585 = vtanh.pop %v578
    %v586 = vmul.f32 %v584, %v493
    %588 = vrot.lane.b32.xlu0 %v585, 64
    %v589 = vpop.permute.xlu0 %588
    %v591 = vmul.f32 %v584, %v589
    %593 = vrot.lane.b32.xlu0 %v591, 32
    %v594 = vpop.permute.xlu0 %593
    %v596 = vadd.f32 %v586, %v594
    %v597 = vtanh.pop %v596
    %599 = vrot.lane.b32.xlu0 %v597, 64
    %v600 = vpop.permute.xlu0 %599
    %v602 = vmul.f32 %v584, %v600
    %604 = vrot.lane.b32.xlu0 %v602, 32
    %v605 = vpop.permute.xlu0 %604
    %607 = vst.msk [vmem:[#allocation3 + $0x18] sm:$0xff] %vm195, %v605
    %v608 = vld [vmem:[#allocation2 + $0x20] sm:$0xff]
    %v609 = vsel %vm195, %v605, 0
    %611 = vmatprep.subr.mxu0 0.0
    %612 = vmatpush1.msra.mxu0 0.0
    %613 = vmatprep.subr.mxu0 0.0
    %614 = vmatpush1.msra.mxu0 0.0
    %615 = vmatprep.subr.mxu0 0.0
    %616 = vmatpush1.msra.mxu0 0.0
    %617 = vmatprep.subr.mxu0 0.0
    %618 = vmatpush1.msra.mxu0 0.0
    %619 = vmatprep.subr.mxu0 0.0
    %620 = vmatpush1.msra.mxu0 0.0
    %621 = vmatprep.subr.mxu0 0.0
    %622 = vmatpush1.msra.mxu0 0.0
    %623 = vmatprep.subr.mxu0 0.0
    %624 = vmatpush1.msra.mxu0 0.0
    %625 = vmatprep.subr.mxu0 0.0
    %626 = vmatpush1.msra.mxu0 0.0
    %627 = vmatprep.subr.mxu0 0.0
    %628 = vmatpush1.msra.mxu0 0.0
    %629 = vmatprep.subr.mxu0 0.0
    %630 = vmatpush1.msra.mxu0 0.0
    %631 = vmatprep.subr.mxu0 0.0
    %632 = vmatpush1.msra.mxu0 0.0
    %633 = vmatprep.subr.mxu0 0.0
    %634 = vmatpush1.msra.mxu0 0.0
    %635 = vmatprep.subr.mxu0 0.0
    %636 = vmatpush1.msra.mxu0 %v193
    %637 = vmatprep.subr.mxu0 0.0
    %638 = vmatpush1.msra.mxu0 %v192
    %639 = vmatprep.subr.mxu0 0.0
    %640 = vmatpush1.msra.mxu0 %v191
    %641 = vmatprep.subr.mxu0 0.0
    %642 = vmatpush1.msra.mxu0 %v190
    %643 = vmatprep.subr.mxu0 0.0
    %644 = vmatpush2.msra.mxu0 0.0
    %645 = vmatprep.subr.mxu0 0.0
    %646 = vmatpush2.msra.mxu0 0.0
    %647 = vmatprep.subr.mxu0 0.0
    %648 = vmatpush2.msra.mxu0 0.0
    %649 = vmatprep.subr.mxu0 0.0
    %650 = vmatpush2.msra.mxu0 0.0
    %651 = vmatprep.subr.mxu0 0.0
    %652 = vmatpush2.msra.mxu0 0.0
    %653 = vmatprep.subr.mxu0 0.0
    %654 = vmatpush2.msra.mxu0 0.0
    %655 = vmatprep.subr.mxu0 0.0
    %656 = vmatpush2.msra.mxu0 0.0
    %657 = vmatprep.subr.mxu0 0.0
    %658 = vmatpush2.msra.mxu0 0.0
    %659 = vmatprep.subr.mxu0 0.0
    %660 = vmatpush2.msra.mxu0 0.0
    %661 = vmatprep.subr.mxu0 0.0
    %662 = vmatpush2.msra.mxu0 0.0
    %663 = vmatprep.subr.mxu0 0.0
    %664 = vmatpush2.msra.mxu0 0.0
    %665 = vmatprep.subr.mxu0 0.0
    %666 = vmatpush2.msra.mxu0 0.0
    %667 = vmatprep.subr.mxu0 0.0
    %668 = vmatpush2.msra.mxu0 0.0
    %669 = vmatprep.subr.mxu0 0.0
    %670 = vmatpush2.msra.mxu0 0.0
    %671 = vmatprep.subr.mxu0 0.0
    %672 = vmatpush2.msra.mxu0 0.0
    %673 = vmatprep.subr.mxu0 0.0
    %674 = vmatpush2.msra.mxu0 0.0
    %675 = vmatprep.mubr.f32.mxu0 0.0
    %676 = vmatmul.mubr.f32.gmra.mxu0 %v609
    %v677 = vpop.f32.mrf.mxu0
    %v678 = vadd.f32 0.0, %v677
    %v679 = vpop.f32.mrf.mxu0
    %680 = vdwg.mxu0
    %v681 = vadd.f32 %v608, %v678
    %v682 = vxor.u32 %v681, 2147483648
    %v683 = vmul.f32 %v682, 1.442695
    %v684 = vpow.pop %v683
    %v685 = vadd.f32 %v684, 1.0
    %v686 = vrcp.pop %v685
    %v687 = vmul.f32 1.0, %v686
    %v688 = vtanh.pop %v681
    %v689 = vmul.f32 %v687, %v596
    %691 = vrot.lane.b32.xlu0 %v688, 64
    %v692 = vpop.permute.xlu0 %691
    %v694 = vmul.f32 %v687, %v692
    %696 = vrot.lane.b32.xlu0 %v694, 32
    %v697 = vpop.permute.xlu0 %696
    %v699 = vadd.f32 %v689, %v697
    %v700 = vtanh.pop %v699
    %702 = vrot.lane.b32.xlu0 %v700, 64
    %v703 = vpop.permute.xlu0 %702
    %v705 = vmul.f32 %v687, %v703
    %707 = vrot.lane.b32.xlu0 %v705, 32
    %v708 = vpop.permute.xlu0 %707
    %710 = vst.msk [vmem:[#allocation3 + $0x20] sm:$0xff] %vm195, %v708
    %v711 = vld [vmem:[#allocation2 + $0x28] sm:$0xff]
    %v712 = vsel %vm195, %v708, 0
    %714 = vmatprep.subr.mxu0 0.0
    %715 = vmatpush1.msra.mxu0 0.0
    %716 = vmatprep.subr.mxu0 0.0
    %717 = vmatpush1.msra.mxu0 0.0
    %718 = vmatprep.subr.mxu0 0.0
    %719 = vmatpush1.msra.mxu0 0.0
    %720 = vmatprep.subr.mxu0 0.0
    %721 = vmatpush1.msra.mxu0 0.0
    %722 = vmatprep.subr.mxu0 0.0
    %723 = vmatpush1.msra.mxu0 0.0
    %724 = vmatprep.subr.mxu0 0.0
    %725 = vmatpush1.msra.mxu0 0.0
    %726 = vmatprep.subr.mxu0 0.0
    %727 = vmatpush1.msra.mxu0 0.0
    %728 = vmatprep.subr.mxu0 0.0
    %729 = vmatpush1.msra.mxu0 0.0
    %730 = vmatprep.subr.mxu0 0.0
    %731 = vmatpush1.msra.mxu0 0.0
    %732 = vmatprep.subr.mxu0 0.0
    %733 = vmatpush1.msra.mxu0 0.0
    %734 = vmatprep.subr.mxu0 0.0
    %735 = vmatpush1.msra.mxu0 0.0
    %736 = vmatprep.subr.mxu0 0.0
    %737 = vmatpush1.msra.mxu0 0.0
    %738 = vmatprep.subr.mxu0 0.0
    %739 = vmatpush1.msra.mxu0 %v193
    %740 = vmatprep.subr.mxu0 0.0
    %741 = vmatpush1.msra.mxu0 %v192
    %742 = vmatprep.subr.mxu0 0.0
    %743 = vmatpush1.msra.mxu0 %v191
    %744 = vmatprep.subr.mxu0 0.0
    %745 = vmatpush1.msra.mxu0 %v190
    %746 = vmatprep.subr.mxu0 0.0
    %747 = vmatpush2.msra.mxu0 0.0
    %748 = vmatprep.subr.mxu0 0.0
    %749 = vmatpush2.msra.mxu0 0.0
    %750 = vmatprep.subr.mxu0 0.0
    %751 = vmatpush2.msra.mxu0 0.0
    %752 = vmatprep.subr.mxu0 0.0
    %753 = vmatpush2.msra.mxu0 0.0
    %754 = vmatprep.subr.mxu0 0.0
    %755 = vmatpush2.msra.mxu0 0.0
    %756 = vmatprep.subr.mxu0 0.0
    %757 = vmatpush2.msra.mxu0 0.0
    %758 = vmatprep.subr.mxu0 0.0
    %759 = vmatpush2.msra.mxu0 0.0
    %760 = vmatprep.subr.mxu0 0.0
    %761 = vmatpush2.msra.mxu0 0.0
    %762 = vmatprep.subr.mxu0 0.0
    %763 = vmatpush2.msra.mxu0 0.0
    %764 = vmatprep.subr.mxu0 0.0
    %765 = vmatpush2.msra.mxu0 0.0
    %766 = vmatprep.subr.mxu0 0.0
    %767 = vmatpush2.msra.mxu0 0.0
    %768 = vmatprep.subr.mxu0 0.0
    %769 = vmatpush2.msra.mxu0 0.0
    %770 = vmatprep.subr.mxu0 0.0
    %771 = vmatpush2.msra.mxu0 0.0
    %772 = vmatprep.subr.mxu0 0.0
    %773 = vmatpush2.msra.mxu0 0.0
    %774 = vmatprep.subr.mxu0 0.0
    %775 = vmatpush2.msra.mxu0 0.0
    %776 = vmatprep.subr.mxu0 0.0
    %777 = vmatpush2.msra.mxu0 0.0
    %778 = vmatprep.mubr.f32.mxu0 0.0
    %779 = vmatmul.mubr.f32.gmra.mxu0 %v712
    %v780 = vpop.f32.mrf.mxu0
    %v781 = vadd.f32 0.0, %v780
    %v782 = vpop.f32.mrf.mxu0
    %783 = vdwg.mxu0
    %v784 = vadd.f32 %v711, %v781
    %v785 = vxor.u32 %v784, 2147483648
    %v786 = vmul.f32 %v785, 1.442695
    %v787 = vpow.pop %v786
    %v788 = vadd.f32 %v787, 1.0
    %v789 = vrcp.pop %v788
    %v790 = vmul.f32 1.0, %v789
    %v791 = vtanh.pop %v784
    %v792 = vmul.f32 %v790, %v699
    %794 = vrot.lane.b32.xlu0 %v791, 64
    %v795 = vpop.permute.xlu0 %794
    %v797 = vmul.f32 %v790, %v795
    %799 = vrot.lane.b32.xlu0 %v797, 32
    %v800 = vpop.permute.xlu0 %799
    %v802 = vadd.f32 %v792, %v800
    %v803 = vtanh.pop %v802
    %805 = vrot.lane.b32.xlu0 %v803, 64
    %v806 = vpop.permute.xlu0 %805
    %v808 = vmul.f32 %v790, %v806
    %810 = vrot.lane.b32.xlu0 %v808, 32
    %v811 = vpop.permute.xlu0 %810
    %813 = vst.msk [vmem:[#allocation3 + $0x28] sm:$0xff] %vm195, %v811
    %v814 = vld [vmem:[#allocation2 + $0x30] sm:$0xff]
    %v815 = vsel %vm195, %v811, 0
    %817 = vmatprep.subr.mxu0 0.0
    %818 = vmatpush1.msra.mxu0 0.0
    %819 = vmatprep.subr.mxu0 0.0
    %820 = vmatpush1.msra.mxu0 0.0
    %821 = vmatprep.subr.mxu0 0.0
    %822 = vmatpush1.msra.mxu0 0.0
    %823 = vmatprep.subr.mxu0 0.0
    %824 = vmatpush1.msra.mxu0 0.0
    %825 = vmatprep.subr.mxu0 0.0
    %826 = vmatpush1.msra.mxu0 0.0
    %827 = vmatprep.subr.mxu0 0.0
    %828 = vmatpush1.msra.mxu0 0.0
    %829 = vmatprep.subr.mxu0 0.0
    %830 = vmatpush1.msra.mxu0 0.0
    %831 = vmatprep.subr.mxu0 0.0
    %832 = vmatpush1.msra.mxu0 0.0
    %833 = vmatprep.subr.mxu0 0.0
    %834 = vmatpush1.msra.mxu0 0.0
    %835 = vmatprep.subr.mxu0 0.0
    %836 = vmatpush1.msra.mxu0 0.0
    %837 = vmatprep.subr.mxu0 0.0
    %838 = vmatpush1.msra.mxu0 0.0
    %839 = vmatprep.subr.mxu0 0.0
    %840 = vmatpush1.msra.mxu0 0.0
    %841 = vmatprep.subr.mxu0 0.0
    %842 = vmatpush1.msra.mxu0 %v193
    %843 = vmatprep.subr.mxu0 0.0
    %844 = vmatpush1.msra.mxu0 %v192
    %845 = vmatprep.subr.mxu0 0.0
    %846 = vmatpush1.msra.mxu0 %v191
    %847 = vmatprep.subr.mxu0 0.0
    %848 = vmatpush1.msra.mxu0 %v190
    %849 = vmatprep.subr.mxu0 0.0
    %850 = vmatpush2.msra.mxu0 0.0
    %851 = vmatprep.subr.mxu0 0.0
    %852 = vmatpush2.msra.mxu0 0.0
    %853 = vmatprep.subr.mxu0 0.0
    %854 = vmatpush2.msra.mxu0 0.0
    %855 = vmatprep.subr.mxu0 0.0
    %856 = vmatpush2.msra.mxu0 0.0
    %857 = vmatprep.subr.mxu0 0.0
    %858 = vmatpush2.msra.mxu0 0.0
    %859 = vmatprep.subr.mxu0 0.0
    %860 = vmatpush2.msra.mxu0 0.0
    %861 = vmatprep.subr.mxu0 0.0
    %862 = vmatpush2.msra.mxu0 0.0
    %863 = vmatprep.subr.mxu0 0.0
    %864 = vmatpush2.msra.mxu0 0.0
    %865 = vmatprep.subr.mxu0 0.0
    %866 = vmatpush2.msra.mxu0 0.0
    %867 = vmatprep.subr.mxu0 0.0
    %868 = vmatpush2.msra.mxu0 0.0
    %869 = vmatprep.subr.mxu0 0.0
    %870 = vmatpush2.msra.mxu0 0.0
    %871 = vmatprep.subr.mxu0 0.0
    %872 = vmatpush2.msra.mxu0 0.0
    %873 = vmatprep.subr.mxu0 0.0
    %874 = vmatpush2.msra.mxu0 0.0
    %875 = vmatprep.subr.mxu0 0.0
    %876 = vmatpush2.msra.mxu0 0.0
    %877 = vmatprep.subr.mxu0 0.0
    %878 = vmatpush2.msra.mxu0 0.0
    %879 = vmatprep.subr.mxu0 0.0
    %880 = vmatpush2.msra.mxu0 0.0
    %881 = vmatprep.mubr.f32.mxu0 0.0
    %882 = vmatmul.mubr.f32.gmra.mxu0 %v815
    %v883 = vpop.f32.mrf.mxu0
    %v884 = vadd.f32 0.0, %v883
    %v885 = vpop.f32.mrf.mxu0
    %886 = vdwg.mxu0
    %v887 = vadd.f32 %v814, %v884
    %v888 = vxor.u32 %v887, 2147483648
    %v889 = vmul.f32 %v888, 1.442695
    %v890 = vpow.pop %v889
    %v891 = vadd.f32 %v890, 1.0
    %v892 = vrcp.pop %v891
    %v893 = vmul.f32 1.0, %v892
    %v894 = vtanh.pop %v887
    %v895 = vmul.f32 %v893, %v802
    %897 = vrot.lane.b32.xlu0 %v894, 64
    %v898 = vpop.permute.xlu0 %897
    %v900 = vmul.f32 %v893, %v898
    %902 = vrot.lane.b32.xlu0 %v900, 32
    %v903 = vpop.permute.xlu0 %902
    %v905 = vadd.f32 %v895, %v903
    %v906 = vtanh.pop %v905
    %908 = vrot.lane.b32.xlu0 %v906, 64
    %v909 = vpop.permute.xlu0 %908
    %v911 = vmul.f32 %v893, %v909
    %913 = vrot.lane.b32.xlu0 %v911, 32
    %v914 = vpop.permute.xlu0 %913
    %916 = vst.msk [vmem:[#allocation3 + $0x30] sm:$0xff] %vm195, %v914
    %v917 = vld [vmem:[#allocation2 + $0x38] sm:$0xff]
    %v918 = vsel %vm195, %v914, 0
    %920 = vmatprep.subr.mxu0 0.0
    %921 = vmatpush1.msra.mxu0 0.0
    %922 = vmatprep.subr.mxu0 0.0
    %923 = vmatpush1.msra.mxu0 0.0
    %924 = vmatprep.subr.mxu0 0.0
    %925 = vmatpush1.msra.mxu0 0.0
    %926 = vmatprep.subr.mxu0 0.0
    %927 = vmatpush1.msra.mxu0 0.0
    %928 = vmatprep.subr.mxu0 0.0
    %929 = vmatpush1.msra.mxu0 0.0
    %930 = vmatprep.subr.mxu0 0.0
    %931 = vmatpush1.msra.mxu0 0.0
    %932 = vmatprep.subr.mxu0 0.0
    %933 = vmatpush1.msra.mxu0 0.0
    %934 = vmatprep.subr.mxu0 0.0
    %935 = vmatpush1.msra.mxu0 0.0
    %936 = vmatprep.subr.mxu0 0.0
    %937 = vmatpush1.msra.mxu0 0.0
    %938 = vmatprep.subr.mxu0 0.0
    %939 = vmatpush1.msra.mxu0 0.0
    %940 = vmatprep.subr.mxu0 0.0
    %941 = vmatpush1.msra.mxu0 0.0
    %942 = vmatprep.subr.mxu0 0.0
    %943 = vmatpush1.msra.mxu0 0.0
    %944 = vmatprep.subr.mxu0 0.0
    %945 = vmatpush1.msra.mxu0 %v193
    %946 = vmatprep.subr.mxu0 0.0
    %947 = vmatpush1.msra.mxu0 %v192
    %948 = vmatprep.subr.mxu0 0.0
    %949 = vmatpush1.msra.mxu0 %v191
    %950 = vmatprep.subr.mxu0 0.0
    %951 = vmatpush1.msra.mxu0 %v190
    %952 = vmatprep.subr.mxu0 0.0
    %953 = vmatpush2.msra.mxu0 0.0
    %954 = vmatprep.subr.mxu0 0.0
    %955 = vmatpush2.msra.mxu0 0.0
    %956 = vmatprep.subr.mxu0 0.0
    %957 = vmatpush2.msra.mxu0 0.0
    %958 = vmatprep.subr.mxu0 0.0
    %959 = vmatpush2.msra.mxu0 0.0
    %960 = vmatprep.subr.mxu0 0.0
    %961 = vmatpush2.msra.mxu0 0.0
    %962 = vmatprep.subr.mxu0 0.0
    %963 = vmatpush2.msra.mxu0 0.0
    %964 = vmatprep.subr.mxu0 0.0
    %965 = vmatpush2.msra.mxu0 0.0
    %966 = vmatprep.subr.mxu0 0.0
    %967 = vmatpush2.msra.mxu0 0.0
    %968 = vmatprep.subr.mxu0 0.0
    %969 = vmatpush2.msra.mxu0 0.0
    %970 = vmatprep.subr.mxu0 0.0
    %971 = vmatpush2.msra.mxu0 0.0
    %972 = vmatprep.subr.mxu0 0.0
    %973 = vmatpush2.msra.mxu0 0.0
    %974 = vmatprep.subr.mxu0 0.0
    %975 = vmatpush2.msra.mxu0 0.0
    %976 = vmatprep.subr.mxu0 0.0
    %977 = vmatpush2.msra.mxu0 0.0
    %978 = vmatprep.subr.mxu0 0.0
    %979 = vmatpush2.msra.mxu0 0.0
    %980 = vmatprep.subr.mxu0 0.0
    %981 = vmatpush2.msra.mxu0 0.0
    %982 = vmatprep.subr.mxu0 0.0
    %983 = vmatpush2.msra.mxu0 0.0
    %984 = vmatprep.mubr.f32.mxu0 0.0
    %985 = vmatmul.mubr.f32.gmra.mxu0 %v918
    %v986 = vpop.f32.mrf.mxu0
    %v987 = vadd.f32 0.0, %v986
    %v988 = vpop.f32.mrf.mxu0
    %989 = vdwg.mxu0
    %v990 = vadd.f32 %v917, %v987
    %v991 = vxor.u32 %v990, 2147483648
    %v992 = vmul.f32 %v991, 1.442695
    %v993 = vpow.pop %v992
    %v994 = vadd.f32 %v993, 1.0
    %v995 = vrcp.pop %v994
    %v996 = vmul.f32 1.0, %v995
    %v997 = vtanh.pop %v990
    %v998 = vmul.f32 %v996, %v905
    %1000 = vrot.lane.b32.xlu0 %v997, 64
    %v1001 = vpop.permute.xlu0 %1000
    %v1003 = vmul.f32 %v996, %v1001
    %1005 = vrot.lane.b32.xlu0 %v1003, 32
    %v1006 = vpop.permute.xlu0 %1005
    %v1008 = vadd.f32 %v998, %v1006
    %v1009 = vtanh.pop %v1008
    %1011 = vrot.lane.b32.xlu0 %v1009, 64
    %v1012 = vpop.permute.xlu0 %1011
    %v1014 = vmul.f32 %v996, %v1012
    %1016 = vrot.lane.b32.xlu0 %v1014, 32
    %v1017 = vpop.permute.xlu0 %1016
    %1019 = vst.msk [vmem:[#allocation3 + $0x38] sm:$0xff] %vm195, %v1017
    %v1020 = vld [vmem:[#allocation3] sm:$0xff]
    %v1021 = vld [vmem:[#allocation3 + $0x8] sm:$0xff]
    %v1022 = vld [vmem:[#allocation3 + $0x10] sm:$0xff]
    %v1023 = vld [vmem:[#allocation3 + $0x18] sm:$0xff]
    %v1024 = vld [vmem:[#allocation3 + $0x20] sm:$0xff]
    %v1025 = vld [vmem:[#allocation3 + $0x28] sm:$0xff]
    %v1026 = vld [vmem:[#allocation3 + $0x30] sm:$0xff]
    %v1027 = vld [vmem:[#allocation3 + $0x38] sm:$0xff]
    %v1028 = vld [vmem:[%s4] sm:$0xff]
    %v1029 = vld [vmem:[%s4 + $0x8] sm:$0xff]
    %v1030 = vld [vmem:[%s4 + $0x10] sm:$0xff]
    %v1031 = vld [vmem:[%s4 + $0x18] sm:$0xff]
    %v1032 = vld [vmem:[%s5] sm:$0x1]
    %v1034 = vlaneseq
    %v1035 = vshrl.u32 %v1034, 7
    %v1036 = vsub.s32 0, %v1035
    %v1037 = vrot.slane %v1032, %v1036
    %v1040 = vsel %vm195, %v1020, 0
    %v1043 = vsel %vm195, %v1021, 0
    %v1046 = vsel %vm195, %v1022, 0
    %v1049 = vsel %vm195, %v1023, 0
    %v1052 = vsel %vm195, %v1024, 0
    %v1055 = vsel %vm195, %v1025, 0
    %v1058 = vsel %vm195, %v1026, 0
    %v1061 = vsel %vm195, %v1027, 0
    %1063 = vmatprep.subr.mxu0 0.0
    %1064 = vmatpush1.msra.mxu0 0.0
    %1065 = vmatprep.subr.mxu0 0.0
    %1066 = vmatpush1.msra.mxu0 0.0
    %1067 = vmatprep.subr.mxu0 0.0
    %1068 = vmatpush1.msra.mxu0 0.0
    %1069 = vmatprep.subr.mxu0 0.0
    %1070 = vmatpush1.msra.mxu0 0.0
    %1071 = vmatprep.subr.mxu0 0.0
    %1072 = vmatpush1.msra.mxu0 0.0
    %1073 = vmatprep.subr.mxu0 0.0
    %1074 = vmatpush1.msra.mxu0 0.0
    %1075 = vmatprep.subr.mxu0 0.0
    %1076 = vmatpush1.msra.mxu0 0.0
    %1077 = vmatprep.subr.mxu0 0.0
    %1078 = vmatpush1.msra.mxu0 0.0
    %1079 = vmatprep.subr.mxu0 0.0
    %1080 = vmatpush1.msra.mxu0 0.0
    %1081 = vmatprep.subr.mxu0 0.0
    %1082 = vmatpush1.msra.mxu0 0.0
    %1083 = vmatprep.subr.mxu0 0.0
    %1084 = vmatpush1.msra.mxu0 0.0
    %1085 = vmatprep.subr.mxu0 0.0
    %1086 = vmatpush1.msra.mxu0 0.0
    %1087 = vmatprep.subr.mxu0 0.0
    %1088 = vmatpush1.msra.mxu0 %v1031
    %1089 = vmatprep.subr.mxu0 0.0
    %1090 = vmatpush1.msra.mxu0 %v1030
    %1091 = vmatprep.subr.mxu0 0.0
    %1092 = vmatpush1.msra.mxu0 %v1029
    %1093 = vmatprep.subr.mxu0 0.0
    %1094 = vmatpush1.msra.mxu0 %v1028
    %1095 = vmatprep.subr.mxu0 0.0
    %1096 = vmatpush2.msra.mxu0 0.0
    %1097 = vmatprep.subr.mxu0 0.0
    %1098 = vmatpush2.msra.mxu0 0.0
    %1099 = vmatprep.subr.mxu0 0.0
    %1100 = vmatpush2.msra.mxu0 0.0
    %1101 = vmatprep.subr.mxu0 0.0
    %1102 = vmatpush2.msra.mxu0 0.0
    %1103 = vmatprep.subr.mxu0 0.0
    %1104 = vmatpush2.msra.mxu0 0.0
    %1105 = vmatprep.subr.mxu0 0.0
    %1106 = vmatpush2.msra.mxu0 0.0
    %1107 = vmatprep.subr.mxu0 0.0
    %1108 = vmatpush2.msra.mxu0 0.0
    %1109 = vmatprep.subr.mxu0 0.0
    %1110 = vmatpush2.msra.mxu0 0.0
    %1111 = vmatprep.subr.mxu0 0.0
    %1112 = vmatpush2.msra.mxu0 0.0
    %1113 = vmatprep.subr.mxu0 0.0
    %1114 = vmatpush2.msra.mxu0 0.0
    %1115 = vmatprep.subr.mxu0 0.0
    %1116 = vmatpush2.msra.mxu0 0.0
    %1117 = vmatprep.subr.mxu0 0.0
    %1118 = vmatpush2.msra.mxu0 0.0
    %1119 = vmatprep.subr.mxu0 0.0
    %1120 = vmatpush2.msra.mxu0 0.0
    %1121 = vmatprep.subr.mxu0 0.0
    %1122 = vmatpush2.msra.mxu0 0.0
    %1123 = vmatprep.subr.mxu0 0.0
    %1124 = vmatpush2.msra.mxu0 0.0
    %1125 = vmatprep.subr.mxu0 0.0
    %1126 = vmatpush2.msra.mxu0 0.0
    %1127 = vmatprep.mubr.f32.mxu0 0.0
    %1128 = vmatmul.mubr.f32.gmra.mxu0 %v1040
    %v1129 = vpop.f32.mrf.mxu0
    %v1130 = vadd.f32 %v1037, %v1129
    %v1131 = vpop.f32.mrf.mxu0
    %1132 = vmatprep.mubr.f32.mxu0 0.0
    %1133 = vmatmul.mubr.f32.gmra.mxu0 %v1043
    %v1134 = vpop.f32.mrf.mxu0
    %v1135 = vadd.f32 %v1037, %v1134
    %v1136 = vpop.f32.mrf.mxu0
    %1137 = vmatprep.mubr.f32.mxu0 0.0
    %1138 = vmatmul.mubr.f32.gmra.mxu0 %v1046
    %v1139 = vpop.f32.mrf.mxu0
    %v1140 = vadd.f32 %v1037, %v1139
    %v1141 = vpop.f32.mrf.mxu0
    %1142 = vmatprep.mubr.f32.mxu0 0.0
    %1143 = vmatmul.mubr.f32.gmra.mxu0 %v1049
    %v1144 = vpop.f32.mrf.mxu0
    %v1145 = vadd.f32 %v1037, %v1144
    %v1146 = vpop.f32.mrf.mxu0
    %1147 = vmatprep.mubr.f32.mxu0 0.0
    %1148 = vmatmul.mubr.f32.gmra.mxu0 %v1052
    %v1149 = vpop.f32.mrf.mxu0
    %v1150 = vadd.f32 %v1037, %v1149
    %v1151 = vpop.f32.mrf.mxu0
    %1152 = vmatprep.mubr.f32.mxu0 0.0
    %1153 = vmatmul.mubr.f32.gmra.mxu0 %v1055
    %v1154 = vpop.f32.mrf.mxu0
    %v1155 = vadd.f32 %v1037, %v1154
    %v1156 = vpop.f32.mrf.mxu0
    %1157 = vmatprep.mubr.f32.mxu0 0.0
    %1158 = vmatmul.mubr.f32.gmra.mxu0 %v1058
    %v1159 = vpop.f32.mrf.mxu0
    %v1160 = vadd.f32 %v1037, %v1159
    %v1161 = vpop.f32.mrf.mxu0
    %1162 = vmatprep.mubr.f32.mxu0 0.0
    %1163 = vmatmul.mubr.f32.gmra.mxu0 %v1061
    %v1164 = vpop.f32.mrf.mxu0
    %v1165 = vadd.f32 %v1037, %v1164
    %v1166 = vpop.f32.mrf.mxu0
    %1167 = vdwg.mxu0
    %1168 = vst [vmem:[#allocation4] sm:$0xff] %v1130
    %1169 = vst [vmem:[#allocation4 + $0x8] sm:$0xff] %v1135
    %1170 = vst [vmem:[#allocation4 + $0x10] sm:$0xff] %v1140
    %1171 = vst [vmem:[#allocation4 + $0x18] sm:$0xff] %v1145
    %1172 = vst [vmem:[#allocation4 + $0x20] sm:$0xff] %v1150
    %1173 = vst [vmem:[#allocation4 + $0x28] sm:$0xff] %v1155
    %1174 = vst [vmem:[#allocation4 + $0x30] sm:$0xff] %v1160
    %1175 = vst [vmem:[#allocation4 + $0x38] sm:$0xff] %v1165
    %1176 = vst.msk [vmem:[#allocation6] sm:$0xff] %vm195, %v1017
    %1178 = vrot.lane.b32.xlu0 %v1008, 96
    %v1179 = vpop.permute.xlu0 %1178
    %1181 = vst.msk [vmem:[#allocation8] sm:$0xff] %vm195, %v1179
    // Predicated region
    $region26: #{tpu_custom_call.1} parent=1 // pred_check
      _
    $region27: #{tpu_custom_call.1} parent=1 // pred_check_branch
      %1183 = sbr.rel (0) target = $region29
    $region28: #{tpu_custom_call.1} parent=1 // pred_region
      %s1185 = ssub.s32 1024, 1024
      %1186 = vsyncadd [#allocation5], %s1185
      %s1187 = sshll.u32 [#allocation4], 4
      %s1188 = int_to_ptr.vmem [resolvable:$true] %s1187
      %1193 = dma.vmem_to_hbm [thread:$0]  %s1188, 1024, %s6, [#allocation5], 128, 128, 8
    $region29: #{tpu_custom_call.1} parent=1 // pred_fallthru
      _
    // Predicated region
    $region30: #{tpu_custom_call.1} parent=1 // pred_check
      _
    $region31: #{tpu_custom_call.1} parent=1 // pred_check_branch
      %1195 = sbr.rel (0) target = $region33
    $region32: #{tpu_custom_call.1} parent=1 // pred_region
      %s1197 = ssub.s32 128, 128
      %1198 = vsyncadd [#allocation7], %s1197
      %s1200 = sshll.u32 [#allocation6], 4
      %s1201 = int_to_ptr.vmem [resolvable:$true] %s1200
      %1203 = dma.vmem_to_hbm [thread:$0]  %s1201, 128, %s7, [#allocation7]
    $region33: #{tpu_custom_call.1} parent=1 // pred_fallthru
      _
    // Predicated region
    $region34: #{tpu_custom_call.1} parent=1 // pred_check
      _
    $region35: #{tpu_custom_call.1} parent=1 // pred_check_branch
      %1205 = sbr.rel (0) target = $region37
    $region36: #{tpu_custom_call.1} parent=1 // pred_region
      %s1207 = ssub.s32 128, 128
      %1208 = vsyncadd [#allocation7], %s1207
      %s1210 = sshll.u32 [#allocation8], 4
      %s1211 = int_to_ptr.vmem [resolvable:$true] %s1210
      %1213 = dma.vmem_to_hbm [thread:$0]  %s1211, 128, %s8, [#allocation7]
    $region37: #{tpu_custom_call.1} parent=1 // pred_fallthru
      _
    // Predicated region
    $region38: #{tpu_custom_call.1} parent=1 // pred_check
      _
    $region39: #{tpu_custom_call.1} parent=1 // pred_check_branch
      %1215 = sbr.rel (0) target = $region41
    $region40: #{tpu_custom_call.1} parent=1 // pred_region
      %1216 = dma.done [#allocation5], 1024
    $region41: #{tpu_custom_call.1} parent=1 // pred_fallthru
      _
    // Predicated region
    $region42: #{tpu_custom_call.1} parent=1 // pred_check
      _
    $region43: #{tpu_custom_call.1} parent=1 // pred_check_branch
      %1218 = sbr.rel (0) target = $region45
    $region44: #{tpu_custom_call.1} parent=1 // pred_region
      %1219 = dma.done [#allocation7], 128
    $region45: #{tpu_custom_call.1} parent=1 // pred_fallthru
      _
    // Predicated region
    $region46: #{tpu_custom_call.1} parent=1 // pred_check
      _
    $region47: #{tpu_custom_call.1} parent=1 // pred_check_branch
      %1221 = sbr.rel (0) target = $region49
    $region48: #{tpu_custom_call.1} parent=1 // pred_region
      %1222 = dma.done [#allocation7], 128
    $region49: #{tpu_custom_call.1} parent=1 // pred_fallthru
      _
    %1223 = vsyncpa [#allocation5], 1
    %1224 = vsyncpa [#allocation7], 1

</llo_original>
